<compile_context>
chip_gen: v5e
topology: v5e:2x2
jax: 0.10.0
libtpu: 0.0.40
codegen_flags: <defaults>
</compile_context>

<pallas_src>
import math

import numpy as np
import jax
import jax.numpy as jnp
from jax import lax
from jax.experimental import pallas as pl
from jax.experimental.pallas import tpu as pltpu


def _decoder_kernel(x_ref, w_ref, b_ref, o_ref):
    # x_ref: (Hp+2, W+2, Cin)   padded bf16 image for this batch element (resident)
    # w_ref: (9, Cin, 4*Cout)   bf16 fused 3x3-tap weights (resident, zero-padded taps)
    # b_ref: (1, 4*Cout)        f32 bias, tiled over the 4 parities
    # o_ref: (tq*W, 4*Cout)     output row-tile, parity-major in the last (lane) dim
    M, C4 = o_ref.shape
    W = x_ref.shape[1] - 2
    Cin = x_ref.shape[2]
    tq = M // W
    r = pl.program_id(1)

    # Halo row-tile of the padded image: rows [r*tq, r*tq + tq + 2).
    xt = x_ref[pl.ds(r * tq, tq + 2), :, :]                     # (tq+2, W+2, Cin)

    acc = jnp.zeros((M, C4), jnp.float32)
    for t in range(9):                                          # unrolled 3x3 tap loop
        dy, dx = divmod(t, 3)
        tap = xt[dy:dy + tq, dx:dx + W, :].reshape(M, Cin)      # (tq*W, Cin) bf16
        acc = acc + jnp.dot(tap, w_ref[t], preferred_element_type=jnp.float32)

    o_ref[...] = jnp.maximum(acc + b_ref[...], 0.0).astype(o_ref.dtype)


def decoder_block_forward(x, weight, bias, *, tm=512):
    """ConvTranspose2d(k=4, s=2, p=1) + ReLU.

    x:      (N, Cin, H, W)     float32, NCHW (PyTorch convention)
    weight: (Cin, Cout, 4, 4)  PyTorch ConvTranspose2d weight layout
    bias:   (Cout,)
    returns (N, Cout, 2H, 2W)
    """
    # TODO(synk): nn.Dropout() is treated as identity (inference); train/test-time
    #             dropout would need an in-kernel pltpu.prng_seed/prng_random_bits mask.
    N, Cin, H, W = x.shape
    Cout = weight.shape[1]
    out_dtype = x.dtype

    # Row-tile size: ~tm output-grid rows of work per grid step, with tq*W a
    # multiple of 8 so the (tq*W, 4*Cout) output block satisfies TPU tiling.
    g = 8 // math.gcd(W, 8)
    tq = max(g, (max(1, tm // W) // g) * g)
    if tq >= H:
        tq = ((H + g - 1) // g) * g
    Hp = ((H + tq - 1) // tq) * tq        # pad rows -> uniform, pipelined tiles
    R = Hp // tq

    # Padded NHWC image in bf16 (padding also supplies the conv-transpose halo zeros).
    x_nhwc = jnp.transpose(x, (0, 2, 3, 1)).astype(jnp.bfloat16)
    x_pad = jnp.pad(x_nhwc, ((0, 0), (1, 1 + Hp - H), (1, 1), (0, 0)))

    # Fused tap weights Wm[(dy,dx), ci, (py,px,co)]; zero where a parity does not
    # use that tap.  (In a real model this is precomputed once per layer.)
    # Valid (parity, offset) -> kernel index for k=4, s=2, p=1:
    kmap = {(0, -1): 3, (0, 0): 1, (1, 0): 2, (1, 1): 0}
    zero = jnp.zeros((Cin, Cout), weight.dtype)
    taps = []
    for dy in (-1, 0, 1):
        for dx in (-1, 0, 1):
            cols = []
            for py in (0, 1):
                for px in (0, 1):
                    ky, kx = kmap.get((py, dy)), kmap.get((px, dx))
                    cols.append(zero if (ky is None or kx is None)
                                else weight[:, :, ky, kx])
            taps.append(jnp.concatenate(cols, axis=1))          # (Cin, 4*Cout)
    Wm = jnp.stack(taps).astype(jnp.bfloat16)                   # (9, Cin, 4*Cout)
    b4 = jnp.tile(bias.astype(jnp.float32), 4).reshape(1, 4 * Cout)

    # Explicit VMEM budget (cross-generation: v5e default scoped 16 MiB, v7x 64 MiB phys).
    img_b = (Hp + 2) * (W + 2) * Cin * 2
    w_b = 9 * Cin * 4 * Cout * 2
    out_b = tq * W * 4 * Cout * jnp.dtype(out_dtype).itemsize
    acc_b = tq * W * 4 * Cout * 4
    halo_b = (tq + 2) * (W + 2) * Cin * 2
    need = 2 * img_b + 2 * w_b + 2 * out_b + acc_b + 10 * halo_b + (4 << 20)
    vmem_limit = int(min(max(need, 32 << 20), 48 << 20))
    # TODO(synk): for very large Cin*Cout (fused-weight double buffer > ~40 MiB),
    #             the tap axis should become a reduction grid axis instead of resident.

    out = pl.pallas_call(
        _decoder_kernel,
        out_shape=jax.ShapeDtypeStruct((N, Hp * W, 4 * Cout), out_dtype),
        grid=(N, R),
        in_specs=[
            # Full padded image per batch element; constant along the row-tile axis
            # so the pipeline fetches it once per n.
            pl.BlockSpec((None, Hp + 2, W + 2, Cin), lambda n, r: (n, 0, 0, 0)),
            pl.BlockSpec((9, Cin, 4 * Cout), lambda n, r: (0, 0, 0)),
            pl.BlockSpec((1, 4 * Cout), lambda n, r: (0, 0)),
        ],
        out_specs=pl.BlockSpec((None, tq * W, 4 * Cout), lambda n, r: (n, r, 0)),
        compiler_params=pltpu.CompilerParams(
            dimension_semantics=("parallel", "parallel"),
            vmem_limit_bytes=vmem_limit),
    )(x_pad, Wm, b4)

    # Parity re-interleave + NHWC->NCHW as one fused transpose:
    #   y[n, c, 2*qy+py, 2*qx+px] = out[n, qy, qx, py, px, c]
    out6 = out.reshape(N, Hp, W, 2, 2, Cout)[:, :H]
    return jnp.transpose(out6, (0, 5, 1, 3, 2, 4)).reshape(N, Cout, 2 * H, 2 * W)


def _reference(x, weight, bias):
    """Pure-JAX reference: ConvTranspose2d via dilated conv with flipped kernel."""
    Cout = weight.shape[1]
    w_flip = jnp.transpose(weight[:, :, ::-1, ::-1], (1, 0, 2, 3))  # (Cout, Cin, 4, 4)
    y = lax.conv_general_dilated(
        x, w_flip, window_strides=(1, 1), padding=((2, 2), (2, 2)),
        lhs_dilation=(2, 2), rhs_dilation=(1, 1),
        dimension_numbers=("NCHW", "OIHW", "NCHW"),
        precision=lax.Precision.HIGHEST)
    return jnp.maximum(y + bias.reshape(1, Cout, 1, 1), 0.0)


if __name__ == "__main__":
    N, Cin, Cout, H, W = 2, 4, 8, 16, 16

    key = jax.random.PRNGKey(0)
    kx, kw, kb = jax.random.split(key, 3)
    x = jax.random.normal(kx, (N, Cin, H, W), dtype=jnp.float32)
    # ConvTranspose2d weight shape: (in_channels, out_channels, kH, kW)
    weight = 0.1 * jax.random.normal(kw, (Cin, Cout, 4, 4), dtype=jnp.float32)
    bias = 0.1 * jax.random.normal(kb, (Cout,), dtype=jnp.float32)

    fwd = jax.jit(decoder_block_forward)
    y = jax.block_until_ready(fwd(x, weight, bias))
    assert y.shape == (N, Cout, 2 * H, 2 * W)

    # Kernel rounds activations/weights to bf16 (f32 accumulation); compare against
    # an f32 reference evaluated on the same bf16-rounded operands -> tight check.
    xq = x.astype(jnp.bfloat16).astype(jnp.float32)
    wq = weight.astype(jnp.bfloat16).astype(jnp.float32)
    y_ref = jax.block_until_ready(_reference(xq, wq, bias))
    np.testing.assert_allclose(np.asarray(y), np.asarray(y_ref), rtol=1e-3, atol=1e-3)

    print("KERNEL_OK")
</pallas_src>

<mosaic_0001>
module attributes {stable_mosaic.version = 11 : i64} {
  func.func @_decoder_kernel(%arg0: i32, %arg1: i32, %arg2: memref<1x18x18x4xbf16, #tpu.memory_space<vmem>>, %arg3: memref<9x4x32xbf16, #tpu.memory_space<vmem>>, %arg4: memref<1x32xf32, #tpu.memory_space<vmem>>, %arg5: memref<1x256x32xf32, #tpu.memory_space<vmem>>) attributes {dimension_semantics = [#tpu.dimension_semantics<parallel>, #tpu.dimension_semantics<parallel>], iteration_bounds = array<i64: 2, 1>, scalar_prefetch = 0 : i64, scratch_operands = 0 : i64, tpu.core_type = #tpu.core_type<tc>, window_params = [{transform_indices = @transform_0, window_bounds = array<i64: 1, 18, 18, 4>}, {pipeline_mode = #tpu.pipeline_mode<synchronous>, transform_indices = @transform_1, window_bounds = array<i64: 9, 4, 32>}, {pipeline_mode = #tpu.pipeline_mode<synchronous>, transform_indices = @transform_2, window_bounds = array<i64: 1, 32>}, {transform_indices = @transform_3, window_bounds = array<i64: 1, 256, 32>}]} {
    %c16_i32 = arith.constant 16 : i32
    %0 = arith.muli %arg1, %c16_i32 : i32
    %c0 = arith.constant 0 : index
    %1 = arith.index_cast %0 : i32 to index
    %c0_0 = arith.constant 0 : index
    %c0_1 = arith.constant 0 : index
    %2 = vector.load %arg2[%c0, %1, %c0_0, %c0_1] : memref<1x18x18x4xbf16, #tpu.memory_space<vmem>>, vector<1x18x18x4xbf16>
    %3 = vector.shape_cast %2 : vector<1x18x18x4xbf16> to vector<18x18x4xbf16>
    %cst = arith.constant 0.000000e+00 : f32
    %4 = vector.broadcast %cst : f32 to vector<256x32xf32>
    %5 = vector.extract_strided_slice %3 {offsets = [0, 0, 0], sizes = [16, 16, 4], strides = [1, 1, 1]} : vector<18x18x4xbf16> to vector<16x16x4xbf16>
    %6 = vector.shape_cast %5 : vector<16x16x4xbf16> to vector<256x4xbf16>
    %c0_2 = arith.constant 0 : index
    %c0_3 = arith.constant 0 : index
    %c0_4 = arith.constant 0 : index
    %7 = vector.load %arg3[%c0_2, %c0_3, %c0_4] : memref<9x4x32xbf16, #tpu.memory_space<vmem>>, vector<1x4x32xbf16>
    %8 = vector.shape_cast %7 : vector<1x4x32xbf16> to vector<4x32xbf16>
    %cst_5 = arith.constant dense<0.000000e+00> : vector<256x32xf32>
    %9 = tpu.matmul %6, %8, %cst_5 {dimension_numbers = #tpu.dot_dimension_numbers<[1], [0], [0], [1], [0, 0, 1, 1], [], []>} : vector<256x4xbf16>, vector<4x32xbf16>, vector<256x32xf32> -> vector<256x32xf32>
    %10 = arith.addf %4, %9 : vector<256x32xf32>
    %11 = vector.extract_strided_slice %3 {offsets = [0, 1, 0], sizes = [16, 16, 4], strides = [1, 1, 1]} : vector<18x18x4xbf16> to vector<16x16x4xbf16>
    %12 = vector.shape_cast %11 : vector<16x16x4xbf16> to vector<256x4xbf16>
    %c1 = arith.constant 1 : index
    %c0_6 = arith.constant 0 : index
    %c0_7 = arith.constant 0 : index
    %13 = vector.load %arg3[%c1, %c0_6, %c0_7] : memref<9x4x32xbf16, #tpu.memory_space<vmem>>, vector<1x4x32xbf16>
    %14 = vector.shape_cast %13 : vector<1x4x32xbf16> to vector<4x32xbf16>
    %cst_8 = arith.constant dense<0.000000e+00> : vector<256x32xf32>
    %15 = tpu.matmul %12, %14, %cst_8 {dimension_numbers = #tpu.dot_dimension_numbers<[1], [0], [0], [1], [0, 0, 1, 1], [], []>} : vector<256x4xbf16>, vector<4x32xbf16>, vector<256x32xf32> -> vector<256x32xf32>
    %16 = arith.addf %10, %15 : vector<256x32xf32>
    %17 = vector.extract_strided_slice %3 {offsets = [0, 2, 0], sizes = [16, 16, 4], strides = [1, 1, 1]} : vector<18x18x4xbf16> to vector<16x16x4xbf16>
    %18 = vector.shape_cast %17 : vector<16x16x4xbf16> to vector<256x4xbf16>
    %c2 = arith.constant 2 : index
    %c0_9 = arith.constant 0 : index
    %c0_10 = arith.constant 0 : index
    %19 = vector.load %arg3[%c2, %c0_9, %c0_10] : memref<9x4x32xbf16, #tpu.memory_space<vmem>>, vector<1x4x32xbf16>
    %20 = vector.shape_cast %19 : vector<1x4x32xbf16> to vector<4x32xbf16>
    %cst_11 = arith.constant dense<0.000000e+00> : vector<256x32xf32>
    %21 = tpu.matmul %18, %20, %cst_11 {dimension_numbers = #tpu.dot_dimension_numbers<[1], [0], [0], [1], [0, 0, 1, 1], [], []>} : vector<256x4xbf16>, vector<4x32xbf16>, vector<256x32xf32> -> vector<256x32xf32>
    %22 = arith.addf %16, %21 : vector<256x32xf32>
    %23 = vector.extract_strided_slice %3 {offsets = [1, 0, 0], sizes = [16, 16, 4], strides = [1, 1, 1]} : vector<18x18x4xbf16> to vector<16x16x4xbf16>
    %24 = vector.shape_cast %23 : vector<16x16x4xbf16> to vector<256x4xbf16>
    %c3 = arith.constant 3 : index
    %c0_12 = arith.constant 0 : index
    %c0_13 = arith.constant 0 : index
    %25 = vector.load %arg3[%c3, %c0_12, %c0_13] : memref<9x4x32xbf16, #tpu.memory_space<vmem>>, vector<1x4x32xbf16>
    %26 = vector.shape_cast %25 : vector<1x4x32xbf16> to vector<4x32xbf16>
    %cst_14 = arith.constant dense<0.000000e+00> : vector<256x32xf32>
    %27 = tpu.matmul %24, %26, %cst_14 {dimension_numbers = #tpu.dot_dimension_numbers<[1], [0], [0], [1], [0, 0, 1, 1], [], []>} : vector<256x4xbf16>, vector<4x32xbf16>, vector<256x32xf32> -> vector<256x32xf32>
    %28 = arith.addf %22, %27 : vector<256x32xf32>
    %29 = vector.extract_strided_slice %3 {offsets = [1, 1, 0], sizes = [16, 16, 4], strides = [1, 1, 1]} : vector<18x18x4xbf16> to vector<16x16x4xbf16>
    %30 = vector.shape_cast %29 : vector<16x16x4xbf16> to vector<256x4xbf16>
    %c4 = arith.constant 4 : index
    %c0_15 = arith.constant 0 : index
    %c0_16 = arith.constant 0 : index
    %31 = vector.load %arg3[%c4, %c0_15, %c0_16] : memref<9x4x32xbf16, #tpu.memory_space<vmem>>, vector<1x4x32xbf16>
    %32 = vector.shape_cast %31 : vector<1x4x32xbf16> to vector<4x32xbf16>
    %cst_17 = arith.constant dense<0.000000e+00> : vector<256x32xf32>
    %33 = tpu.matmul %30, %32, %cst_17 {dimension_numbers = #tpu.dot_dimension_numbers<[1], [0], [0], [1], [0, 0, 1, 1], [], []>} : vector<256x4xbf16>, vector<4x32xbf16>, vector<256x32xf32> -> vector<256x32xf32>
    %34 = arith.addf %28, %33 : vector<256x32xf32>
    %35 = vector.extract_strided_slice %3 {offsets = [1, 2, 0], sizes = [16, 16, 4], strides = [1, 1, 1]} : vector<18x18x4xbf16> to vector<16x16x4xbf16>
    %36 = vector.shape_cast %35 : vector<16x16x4xbf16> to vector<256x4xbf16>
    %c5 = arith.constant 5 : index
    %c0_18 = arith.constant 0 : index
    %c0_19 = arith.constant 0 : index
    %37 = vector.load %arg3[%c5, %c0_18, %c0_19] : memref<9x4x32xbf16, #tpu.memory_space<vmem>>, vector<1x4x32xbf16>
    %38 = vector.shape_cast %37 : vector<1x4x32xbf16> to vector<4x32xbf16>
    %cst_20 = arith.constant dense<0.000000e+00> : vector<256x32xf32>
    %39 = tpu.matmul %36, %38, %cst_20 {dimension_numbers = #tpu.dot_dimension_numbers<[1], [0], [0], [1], [0, 0, 1, 1], [], []>} : vector<256x4xbf16>, vector<4x32xbf16>, vector<256x32xf32> -> vector<256x32xf32>
    %40 = arith.addf %34, %39 : vector<256x32xf32>
    %41 = vector.extract_strided_slice %3 {offsets = [2, 0, 0], sizes = [16, 16, 4], strides = [1, 1, 1]} : vector<18x18x4xbf16> to vector<16x16x4xbf16>
    %42 = vector.shape_cast %41 : vector<16x16x4xbf16> to vector<256x4xbf16>
    %c6 = arith.constant 6 : index
    %c0_21 = arith.constant 0 : index
    %c0_22 = arith.constant 0 : index
    %43 = vector.load %arg3[%c6, %c0_21, %c0_22] : memref<9x4x32xbf16, #tpu.memory_space<vmem>>, vector<1x4x32xbf16>
    %44 = vector.shape_cast %43 : vector<1x4x32xbf16> to vector<4x32xbf16>
    %cst_23 = arith.constant dense<0.000000e+00> : vector<256x32xf32>
    %45 = tpu.matmul %42, %44, %cst_23 {dimension_numbers = #tpu.dot_dimension_numbers<[1], [0], [0], [1], [0, 0, 1, 1], [], []>} : vector<256x4xbf16>, vector<4x32xbf16>, vector<256x32xf32> -> vector<256x32xf32>
    %46 = arith.addf %40, %45 : vector<256x32xf32>
    %47 = vector.extract_strided_slice %3 {offsets = [2, 1, 0], sizes = [16, 16, 4], strides = [1, 1, 1]} : vector<18x18x4xbf16> to vector<16x16x4xbf16>
    %48 = vector.shape_cast %47 : vector<16x16x4xbf16> to vector<256x4xbf16>
    %c7 = arith.constant 7 : index
    %c0_24 = arith.constant 0 : index
    %c0_25 = arith.constant 0 : index
    %49 = vector.load %arg3[%c7, %c0_24, %c0_25] : memref<9x4x32xbf16, #tpu.memory_space<vmem>>, vector<1x4x32xbf16>
    %50 = vector.shape_cast %49 : vector<1x4x32xbf16> to vector<4x32xbf16>
    %cst_26 = arith.constant dense<0.000000e+00> : vector<256x32xf32>
    %51 = tpu.matmul %48, %50, %cst_26 {dimension_numbers = #tpu.dot_dimension_numbers<[1], [0], [0], [1], [0, 0, 1, 1], [], []>} : vector<256x4xbf16>, vector<4x32xbf16>, vector<256x32xf32> -> vector<256x32xf32>
    %52 = arith.addf %46, %51 : vector<256x32xf32>
    %53 = vector.extract_strided_slice %3 {offsets = [2, 2, 0], sizes = [16, 16, 4], strides = [1, 1, 1]} : vector<18x18x4xbf16> to vector<16x16x4xbf16>
    %54 = vector.shape_cast %53 : vector<16x16x4xbf16> to vector<256x4xbf16>
    %c8 = arith.constant 8 : index
    %c0_27 = arith.constant 0 : index
    %c0_28 = arith.constant 0 : index
    %55 = vector.load %arg3[%c8, %c0_27, %c0_28] : memref<9x4x32xbf16, #tpu.memory_space<vmem>>, vector<1x4x32xbf16>
    %56 = vector.shape_cast %55 : vector<1x4x32xbf16> to vector<4x32xbf16>
    %cst_29 = arith.constant dense<0.000000e+00> : vector<256x32xf32>
    %57 = tpu.matmul %54, %56, %cst_29 {dimension_numbers = #tpu.dot_dimension_numbers<[1], [0], [0], [1], [0, 0, 1, 1], [], []>} : vector<256x4xbf16>, vector<4x32xbf16>, vector<256x32xf32> -> vector<256x32xf32>
    %58 = arith.addf %52, %57 : vector<256x32xf32>
    %c0_30 = arith.constant 0 : index
    %c0_31 = arith.constant 0 : index
    %59 = vector.load %arg4[%c0_30, %c0_31] : memref<1x32xf32, #tpu.memory_space<vmem>>, vector<1x32xf32>
    %60 = vector.broadcast %59 : vector<1x32xf32> to vector<256x32xf32>
    %61 = arith.addf %58, %60 : vector<256x32xf32>
    %cst_32 = arith.constant 0.000000e+00 : f32
    %62 = vector.broadcast %cst_32 : f32 to vector<256x32xf32>
    %63 = arith.maximumf %61, %62 : vector<256x32xf32>
    %c0_33 = arith.constant 0 : index
    %c0_34 = arith.constant 0 : index
    %c0_35 = arith.constant 0 : index
    %64 = vector.load %arg5[%c0_33, %c0_34, %c0_35] : memref<1x256x32xf32, #tpu.memory_space<vmem>>, vector<1x256x32xf32>
    %65 = vector.shape_cast %64 : vector<1x256x32xf32> to vector<256x32xf32>
    %66 = vector.shape_cast %63 : vector<256x32xf32> to vector<1x256x32xf32>
    tpu.vector_store %arg5[%c0_33, %c0_34, %c0_35], %66 {strides = array<i32>} : memref<1x256x32xf32, #tpu.memory_space<vmem>>, vector<1x256x32xf32>,
    return
  }
  func.func @transform_0(%arg0: i32, %arg1: i32) -> (i32, i32, i32, i32) {
    %c0_i32 = arith.constant 0 : i32
    %c0_i32_0 = arith.constant 0 : i32
    %c0_i32_1 = arith.constant 0 : i32
    %c0_i32_2 = arith.constant 0 : i32
    return %arg0, %c0_i32, %c0_i32_0, %c0_i32_1 : i32, i32, i32, i32
  }
  func.func @transform_1(%arg0: i32, %arg1: i32) -> (i32, i32, i32) {
    %c0_i32 = arith.constant 0 : i32
    %c0_i32_0 = arith.constant 0 : i32
    %c0_i32_1 = arith.constant 0 : i32
    %c0_i32_2 = arith.constant 0 : i32
    return %c0_i32, %c0_i32_0, %c0_i32_1 : i32, i32, i32
  }
  func.func @transform_2(%arg0: i32, %arg1: i32) -> (i32, i32) {
    %c0_i32 = arith.constant 0 : i32
    %c0_i32_0 = arith.constant 0 : i32
    %c0_i32_1 = arith.constant 0 : i32
    return %c0_i32, %c0_i32_0 : i32, i32
  }
  func.func @transform_3(%arg0: i32, %arg1: i32) -> (i32, i32, i32) {
    %c0_i32 = arith.constant 0 : i32
    %c0_i32_0 = arith.constant 0 : i32
    return %arg0, %arg1, %c0_i32 : i32, i32, i32
  }
}

</mosaic_0001>

<llo_original>
// kernel: tile.9
$region0: #{tile.9}
  %s0 = inlined_call_operand.vmem [shape: f32[4,8], index: 0, kind: input, shape index: {}]
  %s1 = inlined_call_operand.vmem [shape: f32[1,32], index: 1, kind: output, shape index: {}]
  $region1: #{tile.9} parent=0
    #allocation0 [shape = 'u8[4096]{0}', space=vmem, size = 0x1000, scoped, tag = 'scoped mem for output reshape']
    #allocation1 [shape = 'u8[4096]{0}', space=vmem, size = 0x1000, scoped, tag = 'scoped mem for input reshape']
    %s3 = ssub.s32 16, 1
    %v4 = vld [vmem:[%s0] sm:%s3]
    %5 = vst [vmem:[#allocation1] sm:%s3] %v4
    %v6 = vld [vmem:[#allocation1] sm:$0x1]
    %vm7 = vcmask 64512
    %8 = vst.msk [vmem:[#allocation0] sm:$0x1] %vm7, %v6
    %s9 = scalar_lea.vmem [#allocation1], 3
    %v10 = vld [vmem:[%s9] sm:$0x1]
    %11 = vrot.lane.b32.xlu0 %v10, 24
    %v12 = vpop.permute.xlu0 %11
    %vm13 = vcmask 261312
    %14 = vst.msk [vmem:[#allocation0] sm:$0x1] %vm13, %v12
    %s15 = scalar_lea.vmem [#allocation1], 2
    %v16 = vld [vmem:[%s15] sm:$0x1]
    %17 = vrot.lane.b32.xlu0 %v16, 16
    %v18 = vpop.permute.xlu0 %17
    %vm19 = vcmask 195712
    %20 = vst.msk [vmem:[#allocation0] sm:$0x1] %vm19, %v18
    %s21 = scalar_lea.vmem [#allocation1], 1
    %v22 = vld [vmem:[%s21] sm:$0x1]
    %23 = vrot.lane.b32.xlu0 %v22, 8
    %v24 = vpop.permute.xlu0 %23
    %vm25 = vcmask 130112
    %26 = vst.msk [vmem:[#allocation0] sm:$0x1] %vm25, %v24
    %s28 = ssub.s32 2, 1
    %v29 = vld [vmem:[#allocation0] sm:%s28]
    %s31 = ssub.s32 2, 1
    %32 = vst [vmem:[%s1] sm:%s31] %v29

// kernel: tile.8
$region0: #{tile.8}
  #allocation0 [shape = 's32[1]{0}', space=sflag, size = 0x4, scoped, tag = 'scoped memory for tile.8']
  %s0 = inlined_call_operand.vmem [shape: f32[8], index: 0, kind: input, shape index: {}]
  %s1 = inlined_call_operand.vmem [shape: f32[4,8], index: 1, kind: output, shape index: {}]
  // Predicated region
  $region2: #{tile.8} parent=0 // pred_check
    _
  $region3: #{tile.8} parent=0 // pred_check_branch
    %3 = sbr.rel (0) target = $region5
  $region4: #{tile.8} parent=0 // pred_region
    _
  $region5: #{tile.8} parent=0 // pred_fallthru
    _
  %v4 = vld [vmem:[%s0] ss:$0 sm:$0xff]
  %5 = vst [vmem:[%s1] sm:$0xf] %v4

// kernel: decoder_block_forward.1
$region0: #{decoder_block_forward.1}
  #allocation0 [shape = 'u32[]', space=smem, size = 0x4, offset = 0x4, fixed_abs, tag = 'smem constant byte address 0x4 - core index']
  #allocation1 [shape = 'u32[72,128]{1,0:T(1,128)}', space=vmem, size = 0x9000, scoped, tag = 'internal scratch']
  %s0 = inlined_call_operand.vmem [shape: bf16[2,18,18,4], index: 0, kind: input, shape index: {}]
  %s1 = inlined_call_operand.vmem [shape: bf16[9,4,32], index: 1, kind: input, shape index: {}]
  %s2 = inlined_call_operand.vmem [shape: f32[1,32], index: 2, kind: input, shape index: {}]
  %s3 = inlined_call_operand.vmem [shape: f32[2,256,32], index: 3, kind: output, shape index: {}]
  %s4 = sld [smem:[#allocation0]]
  $region45: #{decoder_block_forward.1} parent=0
    _
  %s6 = ssub.s32 1, %s4
  %s7 = scalar_select 0, %s6, %s4
  loop: start=0, step=1, limit=4
  $region2: #{decoder_block_forward.1} parent=0 // loop_pre_header
    _
  $region3: #{decoder_block_forward.1} parent=0 // loop_header
    %s9 = sphi 0, %s13
    %p10 = scmp.ge.s32.totalorder %s9, 4
    %s16 = sphi 0, %s28
    %s17 = sphi 0, %s24
    %s18 = sphi 0, %s16
    %s19 = sphi 0, %s17
    %s20 = sphi 0, %s18
    %s21 = sphi 0, %s19
    %s31 = sphi 0, %s33
    %s34 = sphi 0, %s31
    %s35 = sphi 0, %s34
    %s51 = sphi 0, %s35
    %s55 = sphi 0, %s55
    %s57 = sphi 0, %s55
    %s58 = sphi 0, %s57
    %s72 = sphi 0, %s58
    %s76 = sphi 0, %s76
    %s78 = sphi 0, %s76
    %s79 = sphi 0, %s78
    %s93 = sphi 0, %s79
    %s101 = sphi 0, %s103
    %s104 = sphi 0, %s101
    %s105 = sphi 0, %s104
    %s121 = sphi 0, %s105
  $region4: #{decoder_block_forward.1} parent=0 // loop_header_branch
    %12 = sbr.rel (%p10) target = $region8
  $region5: #{decoder_block_forward.1} parent=0 // loop_body
    %s14 = ssub.s32 %s9, 1
    %s15 = ssub.s32 %s9, 2
    %s22 = sadd.s32 1, %s17
    %p23 = scmp.ge.s32.totalorder %s22, 1
    %s24 = scalar_select %p23, 0, %s22
    %s25 = sadd.s32 1, %s16
    %s26 = scalar_select %p23, %s25, %s16
    %p27 = scmp.ge.s32.totalorder %s26, 2
    %s28 = scalar_select %p27, 0, %s26
    %s29 = ssub.s32 %s16, %s28
    %p30 = scmp.eq.s32.totalorder %s29, 0
    %s32 = sadd.s32 %s31, 1
    %s33 = scalar_select %p30, %s31, %s32
    %p36 = pneg %p30
    %p37 = scmp.eq.s32.totalorder %s9, 1
    %p38 = por %p36, %p37
    %p39 = scmp.ne.s32.totalorder %s31, %s34
    %p40 = scmp.eq.s32.totalorder %s9, 0
    %p41 = por %p39, %p40
    %p42 = scmp.ne.s32.totalorder %s31, %s34
    %p43 = scmp.eq.s32.totalorder %s14, 1
    %p44 = por %p42, %p43
    %p45 = scmp.ne.s32.totalorder %s34, %s35
    %p46 = scmp.eq.s32.totalorder %s14, 0
    %p47 = por %p45, %p46
    %p48 = scmp.ne.s32.totalorder %s34, %s35
    %p49 = scmp.eq.s32.totalorder %s15, 1
    %p50 = por %p48, %p49
    %p52 = scmp.ne.s32.totalorder %s35, %s51
    %p53 = scmp.eq.s32.totalorder %s15, 0
    %p54 = por %p52, %p53
    %s56 = sadd.s32 %s55, 1
    %p59 = scmp.eq.s32.totalorder %s9, 1
    %p60 = scmp.ne.s32.totalorder %s55, %s57
    %p61 = scmp.eq.s32.totalorder %s9, 0
    %p62 = por %p60, %p61
    %p63 = scmp.ne.s32.totalorder %s55, %s57
    %p64 = scmp.eq.s32.totalorder %s14, 1
    %p65 = por %p63, %p64
    %p66 = scmp.ne.s32.totalorder %s57, %s58
    %p67 = scmp.eq.s32.totalorder %s14, 0
    %p68 = por %p66, %p67
    %p69 = scmp.ne.s32.totalorder %s57, %s58
    %p70 = scmp.eq.s32.totalorder %s15, 1
    %p71 = por %p69, %p70
    %p73 = scmp.ne.s32.totalorder %s58, %s72
    %p74 = scmp.eq.s32.totalorder %s15, 0
    %p75 = por %p73, %p74
    %s77 = sadd.s32 %s76, 1
    %p80 = scmp.eq.s32.totalorder %s9, 1
    %p81 = scmp.ne.s32.totalorder %s76, %s78
    %p82 = scmp.eq.s32.totalorder %s9, 0
    %p83 = por %p81, %p82
    %p84 = scmp.ne.s32.totalorder %s76, %s78
    %p85 = scmp.eq.s32.totalorder %s14, 1
    %p86 = por %p84, %p85
    %p87 = scmp.ne.s32.totalorder %s78, %s79
    %p88 = scmp.eq.s32.totalorder %s14, 0
    %p89 = por %p87, %p88
    %p90 = scmp.ne.s32.totalorder %s78, %s79
    %p91 = scmp.eq.s32.totalorder %s15, 1
    %p92 = por %p90, %p91
    %p94 = scmp.ne.s32.totalorder %s79, %s93
    %p95 = scmp.eq.s32.totalorder %s15, 0
    %p96 = por %p94, %p95
    %s97 = ssub.s32 %s16, %s28
    %s98 = ssub.s32 %s17, %s24
    %s99 = sor.u32 %s97, %s98
    %p100 = scmp.eq.s32.totalorder %s99, 0
    %s102 = sadd.s32 %s101, 1
    %s103 = scalar_select %p100, %s101, %s102
    %p106 = pneg %p100
    %p107 = scmp.eq.s32.totalorder %s9, 1
    %p108 = por %p106, %p107
    %p109 = scmp.ne.s32.totalorder %s101, %s104
    %p110 = scmp.eq.s32.totalorder %s9, 0
    %p111 = por %p109, %p110
    %p112 = scmp.ne.s32.totalorder %s101, %s104
    %p113 = scmp.eq.s32.totalorder %s14, 1
    %p114 = por %p112, %p113
    %p115 = scmp.ne.s32.totalorder %s104, %s105
    %p116 = scmp.eq.s32.totalorder %s14, 0
    %p117 = por %p115, %p116
    %p118 = scmp.ne.s32.totalorder %s104, %s105
    %p119 = scmp.eq.s32.totalorder %s15, 1
    %p120 = por %p118, %p119
    %p122 = scmp.ne.s32.totalorder %s105, %s121
    %p123 = scmp.eq.s32.totalorder %s15, 0
    %p124 = por %p122, %p123
    %p125 = scmp.le.s32.totalorder 1, %s9
    %p126 = scmp.lt.s32.totalorder %s9, 3
    %p127 = pnand %p125, %p126
    %p128 = pneg %p127
    // Predicated region
    $region9: #{decoder_block_forward.1} parent=5 // pred_check
      _
    $region10: #{decoder_block_forward.1} parent=5 // pred_check_branch
      %130 = sbr.rel (%p127) target = $region12
    $region11: #{decoder_block_forward.1} parent=5 // pred_region
      %s131 = ssub.s32 %s9, 1
      // Predicated region
      $region13: #{decoder_block_forward.1} parent=11 // pred_check
        %p132 = pneg %p68
      $region14: #{decoder_block_forward.1} parent=11 // pred_check_branch
        %134 = sbr.rel (%p132) target = $region16
      $region15: #{decoder_block_forward.1} parent=11 // pred_region
        _
      $region16: #{decoder_block_forward.1} parent=11 // pred_fallthru
        _
      // Predicated region
      $region17: #{decoder_block_forward.1} parent=11 // pred_check
        %p135 = pneg %p89
      $region18: #{decoder_block_forward.1} parent=11 // pred_check_branch
        %137 = sbr.rel (%p135) target = $region20
      $region19: #{decoder_block_forward.1} parent=11 // pred_region
        _
      $region20: #{decoder_block_forward.1} parent=11 // pred_fallthru
        _
    $region12: #{decoder_block_forward.1} parent=5 // pred_fallthru
      _
    %p138 = scmp.lt.s32.totalorder %s9, 2
    // Predicated region
    $region21: #{decoder_block_forward.1} parent=5 // pred_check
      %p139 = pneg %p138
    $region22: #{decoder_block_forward.1} parent=5 // pred_check_branch
      %141 = sbr.rel (%p139) target = $region24
    $region23: #{decoder_block_forward.1} parent=5 // pred_region
      // Predicated region
      $region25: #{decoder_block_forward.1} parent=23 // pred_check
        %p142 = pneg %p41
      $region26: #{decoder_block_forward.1} parent=23 // pred_check_branch
        %144 = sbr.rel (%p142) target = $region28
      $region27: #{decoder_block_forward.1} parent=23 // pred_region
        %p145 = scmp.lt.s32.totalorder %s16, 1
        %s146 = scalar_select %p145, %s16, 1
        %s147 = smul.addr %s146, 54
        %s148 = smul.addr %s147, 4
        %s149 = scalar_lea.vmem %s0, %s148
      $region28: #{decoder_block_forward.1} parent=23 // pred_fallthru
        _
    $region24: #{decoder_block_forward.1} parent=5 // pred_fallthru
      _
    %p150 = scmp.le.s32.totalorder 1, %s9
    %p151 = scmp.lt.s32.totalorder %s9, 3
    %p152 = pnand %p150, %p151
    %p153 = pneg %p152
    // Predicated region
    $region29: #{decoder_block_forward.1} parent=5 // pred_check
      _
    $region30: #{decoder_block_forward.1} parent=5 // pred_check_branch
      %155 = sbr.rel (%p152) target = $region32
    $region31: #{decoder_block_forward.1} parent=5 // pred_region
      %s156 = ssub.s32 %s9, 1
      %p157 = scmp.lt.s32.totalorder %s18, 1
      %s158 = scalar_select %p157, %s18, 1
      %s159 = smul.addr %s158, 54
      %s160 = smul.addr %s159, 4
      %s161 = scalar_lea.vmem %s0, %s160
      %p162 = pneg %p47
      %p163 = pneg %p44
      %p164 = pneg %p68
      %p165 = pneg %p65
      %p166 = pneg %p89
      %p167 = pneg %p86
      %p168 = pneg %p117
      %p169 = pneg %p114
      %s170 = smul.u32 32, %s19
      %p171 = scmp.lt.s32.totalorder %s18, 1
      %s172 = scalar_select %p171, %s18, 1
      %p173 = scmp.lt.s32.totalorder %s170, 31
      %s174 = scalar_select %p173, %s170, 31
      %s175 = smul.addr %s172, 32
      %s176 = sadd.s32 %s174, %s175
      %s177 = smul.addr %s176, 8
      %s178 = scalar_lea.vmem %s3, %s177
      %p179 = scmp.lt.s32.totalorder %s18, 1
      %s180 = scalar_select %p179, %s18, 1
      %s181 = smul.addr %s180, 54
      %s182 = smul.addr %s181, 4
      %s183 = scalar_lea.vmem %s0, %s182
      %s184 = smul.u32 32, %s19
      %p185 = scmp.lt.s32.totalorder %s18, 1
      %s186 = scalar_select %p185, %s18, 1
      %p187 = scmp.lt.s32.totalorder %s184, 31
      %s188 = scalar_select %p187, %s184, 31
      %s189 = smul.addr %s186, 32
      %s190 = sadd.s32 %s188, %s189
      %s191 = smul.addr %s190, 8
      %s192 = scalar_lea.vmem %s3, %s191
      %s193 = smul.u32 32, %s19
      %s195 = smul.u32 %s19, 16
      %s196 = smul.u32 %s195, 3
      %s197 = smul.addr %s196, 4
      %s198 = scalar_lea.vmem %s183, %s197
      %v199 = vld [vmem:[%s198] sm:$0xf]
      %v200 = vld [vmem:[%s198 + $0x4] sm:$0xf]
      %v201 = vld [vmem:[%s198 + $0x8] sm:$0x1]
      %v202 = vld [vmem:[%s198 + $0xc] sm:$0xf]
      %v203 = vld [vmem:[%s198 + $0x10] sm:$0xf]
      %v204 = vld [vmem:[%s198 + $0x14] sm:$0x1]
      %v205 = vld [vmem:[%s198 + $0x18] sm:$0xf]
      %v206 = vld [vmem:[%s198 + $0x1c] sm:$0xf]
      %v207 = vld [vmem:[%s198 + $0x20] sm:$0x1]
      %v208 = vld [vmem:[%s198 + $0x24] sm:$0xf]
      %v209 = vld [vmem:[%s198 + $0x28] sm:$0xf]
      %v210 = vld [vmem:[%s198 + $0x2c] sm:$0x1]
      %v211 = vld [vmem:[%s198 + $0x30] sm:$0xf]
      %v212 = vld [vmem:[%s198 + $0x34] sm:$0xf]
      %v213 = vld [vmem:[%s198 + $0x38] sm:$0x1]
      %v214 = vld [vmem:[%s198 + $0x3c] sm:$0xf]
      %v215 = vld [vmem:[%s198 + $0x40] sm:$0xf]
      %v216 = vld [vmem:[%s198 + $0x44] sm:$0x1]
      %v217 = vld [vmem:[%s198 + $0x48] sm:$0xf]
      %v218 = vld [vmem:[%s198 + $0x4c] sm:$0xf]
      %v219 = vld [vmem:[%s198 + $0x50] sm:$0x1]
      %v220 = vld [vmem:[%s198 + $0x54] sm:$0xf]
      %v221 = vld [vmem:[%s198 + $0x58] sm:$0xf]
      %v222 = vld [vmem:[%s198 + $0x5c] sm:$0x1]
      %v223 = vld [vmem:[%s198 + $0x60] sm:$0xf]
      %v224 = vld [vmem:[%s198 + $0x64] sm:$0xf]
      %v225 = vld [vmem:[%s198 + $0x68] sm:$0x1]
      %v226 = vld [vmem:[%s198 + $0x6c] sm:$0xf]
      %v227 = vld [vmem:[%s198 + $0x70] sm:$0xf]
      %v228 = vld [vmem:[%s198 + $0x74] sm:$0x1]
      %v229 = vld [vmem:[%s198 + $0x78] sm:$0xf]
      %v230 = vld [vmem:[%s198 + $0x7c] sm:$0xf]
      %v231 = vld [vmem:[%s198 + $0x80] sm:$0x1]
      %v232 = vld [vmem:[%s198 + $0x84] sm:$0xf]
      %v233 = vld [vmem:[%s198 + $0x88] sm:$0xf]
      %v234 = vld [vmem:[%s198 + $0x8c] sm:$0x1]
      %v235 = vld [vmem:[%s198 + $0x90] sm:$0xf]
      %v236 = vld [vmem:[%s198 + $0x94] sm:$0xf]
      %v237 = vld [vmem:[%s198 + $0x98] sm:$0x1]
      %v238 = vld [vmem:[%s198 + $0x9c] sm:$0xf]
      %v239 = vld [vmem:[%s198 + $0xa0] sm:$0xf]
      %v240 = vld [vmem:[%s198 + $0xa4] sm:$0x1]
      %v241 = vld [vmem:[%s198 + $0xa8] sm:$0xf]
      %v242 = vld [vmem:[%s198 + $0xac] sm:$0xf]
      %v243 = vld [vmem:[%s198 + $0xb0] sm:$0x1]
      %v244 = vld [vmem:[%s198 + $0xb4] sm:$0xf]
      %v245 = vld [vmem:[%s198 + $0xb8] sm:$0xf]
      %v246 = vld [vmem:[%s198 + $0xbc] sm:$0x1]
      %v247 = vld [vmem:[%s198 + $0xc0] sm:$0xf]
      %v248 = vld [vmem:[%s198 + $0xc4] sm:$0xf]
      %v249 = vld [vmem:[%s198 + $0xc8] sm:$0x1]
      %v250 = vld [vmem:[%s198 + $0xcc] sm:$0xf]
      %v251 = vld [vmem:[%s198 + $0xd0] sm:$0xf]
      %v252 = vld [vmem:[%s198 + $0xd4] sm:$0x1]
      %v253 = vld [vmem:[%s1] sm:$0x3]
      %vm254 = vsmask.f32 3328
      %vm255 = vsmask.f32 7440
      %vm256 = vmor %vm254, %vm255
      %v258 = vshrl.u32 %v199, 16
      %v260 = vrot.slane %v258, 4
      %v261 = vshll.u32 %v199, 16
      %v263 = vrot.slane %v261, 5
      %v264 = vor.u32 %v260, %v263
      %v265 = vrot.slane %v264, 4
      %v267 = vshll.u32 %v200, 16
      %v269 = vrot.slane %v267, 5
      %v270 = vsel %vm256, %v265, %v269
      %v271 = vshrl.u32 %v200, 16
      %v273 = vrot.slane %v271, 4
      %v274 = vor.u32 %v273, %v269
      %v275 = vrot.slane %v274, 4
      %v277 = vshll.u32 %v201, 16
      %v279 = vrot.slane %v277, 5
      %v280 = vsel %vm256, %v275, %v279
      %v282 = vshrl.u32 %v202, 16
      %v284 = vrot.slane %v282, 4
      %v285 = vshll.u32 %v202, 16
      %v287 = vrot.slane %v285, 5
      %v288 = vor.u32 %v284, %v287
      %v289 = vrot.slane %v288, 4
      %v291 = vshll.u32 %v203, 16
      %v293 = vrot.slane %v291, 5
      %v294 = vsel %vm256, %v289, %v293
      %v295 = vshrl.u32 %v203, 16
      %v297 = vrot.slane %v295, 4
      %v298 = vor.u32 %v297, %v293
      %v299 = vrot.slane %v298, 4
      %v301 = vshll.u32 %v204, 16
      %v303 = vrot.slane %v301, 5
      %v304 = vsel %vm256, %v299, %v303
      %v306 = vshrl.u32 %v205, 16
      %v308 = vrot.slane %v306, 4
      %v309 = vshll.u32 %v205, 16
      %v311 = vrot.slane %v309, 5
      %v312 = vor.u32 %v308, %v311
      %v313 = vrot.slane %v312, 4
      %v315 = vshll.u32 %v206, 16
      %v317 = vrot.slane %v315, 5
      %v318 = vsel %vm256, %v313, %v317
      %v319 = vshrl.u32 %v206, 16
      %v321 = vrot.slane %v319, 4
      %v322 = vor.u32 %v321, %v317
      %v323 = vrot.slane %v322, 4
      %v325 = vshll.u32 %v207, 16
      %v327 = vrot.slane %v325, 5
      %v328 = vsel %vm256, %v323, %v327
      %v330 = vshrl.u32 %v208, 16
      %v332 = vrot.slane %v330, 4
      %v333 = vshll.u32 %v208, 16
      %v335 = vrot.slane %v333, 5
      %v336 = vor.u32 %v332, %v335
      %v337 = vrot.slane %v336, 4
      %v339 = vshll.u32 %v209, 16
      %v341 = vrot.slane %v339, 5
      %v342 = vsel %vm256, %v337, %v341
      %v343 = vshrl.u32 %v209, 16
      %v345 = vrot.slane %v343, 4
      %v346 = vor.u32 %v345, %v341
      %v347 = vrot.slane %v346, 4
      %v349 = vshll.u32 %v210, 16
      %v351 = vrot.slane %v349, 5
      %v352 = vsel %vm256, %v347, %v351
      %v354 = vshrl.u32 %v211, 16
      %v356 = vrot.slane %v354, 4
      %v357 = vshll.u32 %v211, 16
      %v359 = vrot.slane %v357, 5
      %v360 = vor.u32 %v356, %v359
      %v361 = vrot.slane %v360, 4
      %v363 = vshll.u32 %v212, 16
      %v365 = vrot.slane %v363, 5
      %v366 = vsel %vm256, %v361, %v365
      %v367 = vshrl.u32 %v212, 16
      %v369 = vrot.slane %v367, 4
      %v370 = vor.u32 %v369, %v365
      %v371 = vrot.slane %v370, 4
      %v373 = vshll.u32 %v213, 16
      %v375 = vrot.slane %v373, 5
      %v376 = vsel %vm256, %v371, %v375
      %v378 = vshrl.u32 %v214, 16
      %v380 = vrot.slane %v378, 4
      %v381 = vshll.u32 %v214, 16
      %v383 = vrot.slane %v381, 5
      %v384 = vor.u32 %v380, %v383
      %v385 = vrot.slane %v384, 4
      %v387 = vshll.u32 %v215, 16
      %v389 = vrot.slane %v387, 5
      %v390 = vsel %vm256, %v385, %v389
      %v391 = vshrl.u32 %v215, 16
      %v393 = vrot.slane %v391, 4
      %v394 = vor.u32 %v393, %v389
      %v395 = vrot.slane %v394, 4
      %v397 = vshll.u32 %v216, 16
      %v399 = vrot.slane %v397, 5
      %v400 = vsel %vm256, %v395, %v399
      %v402 = vshrl.u32 %v217, 16
      %v404 = vrot.slane %v402, 4
      %v405 = vshll.u32 %v217, 16
      %v407 = vrot.slane %v405, 5
      %v408 = vor.u32 %v404, %v407
      %v409 = vrot.slane %v408, 4
      %v411 = vshll.u32 %v218, 16
      %v413 = vrot.slane %v411, 5
      %v414 = vsel %vm256, %v409, %v413
      %v415 = vshrl.u32 %v218, 16
      %v417 = vrot.slane %v415, 4
      %v418 = vor.u32 %v417, %v413
      %v419 = vrot.slane %v418, 4
      %v421 = vshll.u32 %v219, 16
      %v423 = vrot.slane %v421, 5
      %v424 = vsel %vm256, %v419, %v423
      %v426 = vshrl.u32 %v220, 16
      %v428 = vrot.slane %v426, 4
      %v429 = vshll.u32 %v220, 16
      %v431 = vrot.slane %v429, 5
      %v432 = vor.u32 %v428, %v431
      %v433 = vrot.slane %v432, 4
      %v435 = vshll.u32 %v221, 16
      %v437 = vrot.slane %v435, 5
      %v438 = vsel %vm256, %v433, %v437
      %v439 = vshrl.u32 %v221, 16
      %v441 = vrot.slane %v439, 4
      %v442 = vor.u32 %v441, %v437
      %v443 = vrot.slane %v442, 4
      %v445 = vshll.u32 %v222, 16
      %v447 = vrot.slane %v445, 5
      %v448 = vsel %vm256, %v443, %v447
      %v450 = vshrl.u32 %v223, 16
      %v452 = vrot.slane %v450, 4
      %v453 = vshll.u32 %v223, 16
      %v455 = vrot.slane %v453, 5
      %v456 = vor.u32 %v452, %v455
      %v457 = vrot.slane %v456, 4
      %v459 = vshll.u32 %v224, 16
      %v461 = vrot.slane %v459, 5
      %v462 = vsel %vm256, %v457, %v461
      %v463 = vshrl.u32 %v224, 16
      %v465 = vrot.slane %v463, 4
      %v466 = vor.u32 %v465, %v461
      %v467 = vrot.slane %v466, 4
      %v469 = vshll.u32 %v225, 16
      %v471 = vrot.slane %v469, 5
      %v472 = vsel %vm256, %v467, %v471
      %v474 = vshrl.u32 %v226, 16
      %v476 = vrot.slane %v474, 4
      %v477 = vshll.u32 %v226, 16
      %v479 = vrot.slane %v477, 5
      %v480 = vor.u32 %v476, %v479
      %v481 = vrot.slane %v480, 4
      %v483 = vshll.u32 %v227, 16
      %v485 = vrot.slane %v483, 5
      %v486 = vsel %vm256, %v481, %v485
      %v487 = vshrl.u32 %v227, 16
      %v489 = vrot.slane %v487, 4
      %v490 = vor.u32 %v489, %v485
      %v491 = vrot.slane %v490, 4
      %v493 = vshll.u32 %v228, 16
      %v495 = vrot.slane %v493, 5
      %v496 = vsel %vm256, %v491, %v495
      %v498 = vshrl.u32 %v229, 16
      %v500 = vrot.slane %v498, 4
      %v501 = vshll.u32 %v229, 16
      %v503 = vrot.slane %v501, 5
      %v504 = vor.u32 %v500, %v503
      %v505 = vrot.slane %v504, 4
      %v507 = vshll.u32 %v230, 16
      %v509 = vrot.slane %v507, 5
      %v510 = vsel %vm256, %v505, %v509
      %v511 = vshrl.u32 %v230, 16
      %v513 = vrot.slane %v511, 4
      %v514 = vor.u32 %v513, %v509
      %v515 = vrot.slane %v514, 4
      %v517 = vshll.u32 %v231, 16
      %v519 = vrot.slane %v517, 5
      %v520 = vsel %vm256, %v515, %v519
      %v522 = vshrl.u32 %v232, 16
      %v524 = vrot.slane %v522, 4
      %v525 = vshll.u32 %v232, 16
      %v527 = vrot.slane %v525, 5
      %v528 = vor.u32 %v524, %v527
      %v529 = vrot.slane %v528, 4
      %v531 = vshll.u32 %v233, 16
      %v533 = vrot.slane %v531, 5
      %v534 = vsel %vm256, %v529, %v533
      %v535 = vshrl.u32 %v233, 16
      %v537 = vrot.slane %v535, 4
      %v538 = vor.u32 %v537, %v533
      %v539 = vrot.slane %v538, 4
      %v541 = vshll.u32 %v234, 16
      %v543 = vrot.slane %v541, 5
      %v544 = vsel %vm256, %v539, %v543
      %v546 = vshrl.u32 %v235, 16
      %v548 = vrot.slane %v546, 4
      %v549 = vshll.u32 %v235, 16
      %v551 = vrot.slane %v549, 5
      %v552 = vor.u32 %v548, %v551
      %v553 = vrot.slane %v552, 4
      %v555 = vshll.u32 %v236, 16
      %v557 = vrot.slane %v555, 5
      %v558 = vsel %vm256, %v553, %v557
      %v559 = vshrl.u32 %v236, 16
      %v561 = vrot.slane %v559, 4
      %v562 = vor.u32 %v561, %v557
      %v563 = vrot.slane %v562, 4
      %v565 = vshll.u32 %v237, 16
      %v567 = vrot.slane %v565, 5
      %v568 = vsel %vm256, %v563, %v567
      %v570 = vshrl.u32 %v238, 16
      %v572 = vrot.slane %v570, 4
      %v573 = vshll.u32 %v238, 16
      %v575 = vrot.slane %v573, 5
      %v576 = vor.u32 %v572, %v575
      %v577 = vrot.slane %v576, 4
      %v579 = vshll.u32 %v239, 16
      %v581 = vrot.slane %v579, 5
      %v582 = vsel %vm256, %v577, %v581
      %v583 = vshrl.u32 %v239, 16
      %v585 = vrot.slane %v583, 4
      %v586 = vor.u32 %v585, %v581
      %v587 = vrot.slane %v586, 4
      %v589 = vshll.u32 %v240, 16
      %v591 = vrot.slane %v589, 5
      %v592 = vsel %vm256, %v587, %v591
      %v594 = vshrl.u32 %v241, 16
      %v596 = vrot.slane %v594, 4
      %v597 = vshll.u32 %v241, 16
      %v599 = vrot.slane %v597, 5
      %v600 = vor.u32 %v596, %v599
      %v601 = vrot.slane %v600, 4
      %v603 = vshll.u32 %v242, 16
      %v605 = vrot.slane %v603, 5
      %v606 = vsel %vm256, %v601, %v605
      %v607 = vshrl.u32 %v242, 16
      %v609 = vrot.slane %v607, 4
      %v610 = vor.u32 %v609, %v605
      %v611 = vrot.slane %v610, 4
      %v613 = vshll.u32 %v243, 16
      %v615 = vrot.slane %v613, 5
      %v616 = vsel %vm256, %v611, %v615
      %v618 = vshrl.u32 %v244, 16
      %v620 = vrot.slane %v618, 4
      %v621 = vshll.u32 %v244, 16
      %v623 = vrot.slane %v621, 5
      %v624 = vor.u32 %v620, %v623
      %v625 = vrot.slane %v624, 4
      %v627 = vshll.u32 %v245, 16
      %v629 = vrot.slane %v627, 5
      %v630 = vsel %vm256, %v625, %v629
      %v631 = vshrl.u32 %v245, 16
      %v633 = vrot.slane %v631, 4
      %v634 = vor.u32 %v633, %v629
      %v635 = vrot.slane %v634, 4
      %v637 = vshll.u32 %v246, 16
      %v639 = vrot.slane %v637, 5
      %v640 = vsel %vm256, %v635, %v639
      %s641 = scalar_lea.vmem %s1, 2
      %v642 = vld [vmem:[%s641] sm:$0x3]
      %v643 = vunpack.c.l.b16 %v270
      %v644 = vunpack.c.l.b16 %v280
      %v645 = vunpack.c.l.b16 %v294
      %v646 = vunpack.c.l.b16 %v304
      %v647 = vunpack.c.l.b16 %v318
      %v648 = vunpack.c.l.b16 %v328
      %v649 = vunpack.c.l.b16 %v342
      %v650 = vunpack.c.l.b16 %v352
      %v651 = vunpack.c.l.b16 %v366
      %v652 = vunpack.c.l.b16 %v376
      %v653 = vunpack.c.l.b16 %v390
      %v654 = vunpack.c.l.b16 %v400
      %v655 = vunpack.c.l.b16 %v414
      %v656 = vunpack.c.l.b16 %v424
      %v657 = vunpack.c.l.b16 %v438
      %v658 = vunpack.c.l.b16 %v448
      %v659 = vunpack.c.l.b16 %v462
      %v660 = vunpack.c.l.b16 %v472
      %v661 = vunpack.c.l.b16 %v486
      %v662 = vunpack.c.l.b16 %v496
      %v663 = vunpack.c.l.b16 %v510
      %v664 = vunpack.c.l.b16 %v520
      %v665 = vunpack.c.l.b16 %v534
      %v666 = vunpack.c.l.b16 %v544
      %v667 = vunpack.c.l.b16 %v558
      %v668 = vunpack.c.l.b16 %v568
      %v669 = vunpack.c.l.b16 %v582
      %v670 = vunpack.c.l.b16 %v592
      %v671 = vunpack.c.l.b16 %v606
      %v672 = vunpack.c.l.b16 %v616
      %v673 = vunpack.c.l.b16 %v630
      %v674 = vunpack.c.l.b16 %v640
      %v675 = vpack.c.b16 %v644, %v643
      %v676 = vpack.c.b16 %v646, %v645
      %v677 = vpack.c.b16 %v648, %v647
      %v678 = vpack.c.b16 %v650, %v649
      %v679 = vpack.c.b16 %v652, %v651
      %v680 = vpack.c.b16 %v654, %v653
      %v681 = vpack.c.b16 %v656, %v655
      %v682 = vpack.c.b16 %v658, %v657
      %v683 = vpack.c.b16 %v660, %v659
      %v684 = vpack.c.b16 %v662, %v661
      %v685 = vpack.c.b16 %v664, %v663
      %v686 = vpack.c.b16 %v666, %v665
      %v687 = vpack.c.b16 %v668, %v667
      %v688 = vpack.c.b16 %v670, %v669
      %v689 = vpack.c.b16 %v672, %v671
      %v690 = vpack.c.b16 %v674, %v673
      %vm691 = vcmask 31744
      %v693 = vsel %vm691, %v675, 0
      %v696 = vsel %vm691, %v676, 0
      %v699 = vsel %vm691, %v677, 0
      %v702 = vsel %vm691, %v678, 0
      %v705 = vsel %vm691, %v679, 0
      %v708 = vsel %vm691, %v680, 0
      %v711 = vsel %vm691, %v681, 0
      %v714 = vsel %vm691, %v682, 0
      %v717 = vsel %vm691, %v683, 0
      %v720 = vsel %vm691, %v684, 0
      %v723 = vsel %vm691, %v685, 0
      %v726 = vsel %vm691, %v686, 0
      %v729 = vsel %vm691, %v687, 0
      %v732 = vsel %vm691, %v688, 0
      %v735 = vsel %vm691, %v689, 0
      %v738 = vsel %vm691, %v690, 0
      %vm740 = vcmask 1041408
      %v742 = vsel %vm740, %v642, 0
      %744 = vmatpush.bf16.msra.mxu0 0
      %745 = vmatpush.bf16.msra.mxu0 0
      %746 = vmatpush.bf16.msra.mxu0 0
      %747 = vmatpush.bf16.msra.mxu0 0
      %748 = vmatpush.bf16.msra.mxu0 0
      %749 = vmatpush.bf16.msra.mxu0 0
      %750 = vmatpush.bf16.msra.mxu0 0
      %751 = vmatpush.bf16.msra.mxu0 %v742
      %752 = vmatmul.bf16.gmra.mxu0 %v693
      %v753 = vpop.f32.mrf.mxu0
      %v754 = vadd.f32 0.0, %v753
      %v755 = vpop.f32.mrf.mxu0
      %v756 = vadd.f32 0.0, %v755
      %757 = vmatmul.bf16.gmra.mxu0 %v696
      %v758 = vpop.f32.mrf.mxu0
      %v759 = vadd.f32 0.0, %v758
      %v760 = vpop.f32.mrf.mxu0
      %v761 = vadd.f32 0.0, %v760
      %762 = vmatmul.bf16.gmra.mxu0 %v699
      %v763 = vpop.f32.mrf.mxu0
      %v764 = vadd.f32 0.0, %v763
      %v765 = vpop.f32.mrf.mxu0
      %v766 = vadd.f32 0.0, %v765
      %767 = vmatmul.bf16.gmra.mxu0 %v702
      %v768 = vpop.f32.mrf.mxu0
      %v769 = vadd.f32 0.0, %v768
      %v770 = vpop.f32.mrf.mxu0
      %v771 = vadd.f32 0.0, %v770
      %772 = vmatmul.bf16.gmra.mxu0 %v705
      %v773 = vpop.f32.mrf.mxu0
      %v774 = vadd.f32 0.0, %v773
      %v775 = vpop.f32.mrf.mxu0
      %v776 = vadd.f32 0.0, %v775
      %777 = vmatmul.bf16.gmra.mxu0 %v708
      %v778 = vpop.f32.mrf.mxu0
      %v779 = vadd.f32 0.0, %v778
      %v780 = vpop.f32.mrf.mxu0
      %v781 = vadd.f32 0.0, %v780
      %782 = vmatmul.bf16.gmra.mxu0 %v711
      %v783 = vpop.f32.mrf.mxu0
      %v784 = vadd.f32 0.0, %v783
      %v785 = vpop.f32.mrf.mxu0
      %v786 = vadd.f32 0.0, %v785
      %787 = vmatmul.bf16.gmra.mxu0 %v714
      %v788 = vpop.f32.mrf.mxu0
      %v789 = vadd.f32 0.0, %v788
      %v790 = vpop.f32.mrf.mxu0
      %v791 = vadd.f32 0.0, %v790
      %792 = vmatmul.bf16.gmra.mxu0 %v717
      %v793 = vpop.f32.mrf.mxu0
      %v794 = vadd.f32 0.0, %v793
      %v795 = vpop.f32.mrf.mxu0
      %v796 = vadd.f32 0.0, %v795
      %797 = vmatmul.bf16.gmra.mxu0 %v720
      %v798 = vpop.f32.mrf.mxu0
      %v799 = vadd.f32 0.0, %v798
      %v800 = vpop.f32.mrf.mxu0
      %v801 = vadd.f32 0.0, %v800
      %802 = vmatmul.bf16.gmra.mxu0 %v723
      %v803 = vpop.f32.mrf.mxu0
      %v804 = vadd.f32 0.0, %v803
      %v805 = vpop.f32.mrf.mxu0
      %v806 = vadd.f32 0.0, %v805
      %807 = vmatmul.bf16.gmra.mxu0 %v726
      %v808 = vpop.f32.mrf.mxu0
      %v809 = vadd.f32 0.0, %v808
      %v810 = vpop.f32.mrf.mxu0
      %v811 = vadd.f32 0.0, %v810
      %812 = vmatmul.bf16.gmra.mxu0 %v729
      %v813 = vpop.f32.mrf.mxu0
      %v814 = vadd.f32 0.0, %v813
      %v815 = vpop.f32.mrf.mxu0
      %v816 = vadd.f32 0.0, %v815
      %817 = vmatmul.bf16.gmra.mxu0 %v732
      %v818 = vpop.f32.mrf.mxu0
      %v819 = vadd.f32 0.0, %v818
      %v820 = vpop.f32.mrf.mxu0
      %v821 = vadd.f32 0.0, %v820
      %822 = vmatmul.bf16.gmra.mxu0 %v735
      %v823 = vpop.f32.mrf.mxu0
      %v824 = vadd.f32 0.0, %v823
      %v825 = vpop.f32.mrf.mxu0
      %v826 = vadd.f32 0.0, %v825
      %827 = vmatmul.bf16.gmra.mxu0 %v738
      %v828 = vpop.f32.mrf.mxu0
      %v829 = vadd.f32 0.0, %v828
      %v830 = vpop.f32.mrf.mxu0
      %v831 = vadd.f32 0.0, %v830
      %832 = vdwg.mxu0
      %v865 = vunpack.c.l.b16 %v199
      %v866 = vunpack.c.l.b16 %v200
      %v867 = vunpack.c.l.b16 %v202
      %v868 = vunpack.c.l.b16 %v203
      %v869 = vunpack.c.l.b16 %v205
      %v870 = vunpack.c.l.b16 %v206
      %v871 = vunpack.c.l.b16 %v208
      %v872 = vunpack.c.l.b16 %v209
      %v873 = vunpack.c.l.b16 %v211
      %v874 = vunpack.c.l.b16 %v212
      %v875 = vunpack.c.l.b16 %v214
      %v876 = vunpack.c.l.b16 %v215
      %v877 = vunpack.c.l.b16 %v217
      %v878 = vunpack.c.l.b16 %v218
      %v879 = vunpack.c.l.b16 %v220
      %v880 = vunpack.c.l.b16 %v221
      %v881 = vunpack.c.l.b16 %v223
      %v882 = vunpack.c.l.b16 %v224
      %v883 = vunpack.c.l.b16 %v226
      %v884 = vunpack.c.l.b16 %v227
      %v885 = vunpack.c.l.b16 %v229
      %v886 = vunpack.c.l.b16 %v230
      %v887 = vunpack.c.l.b16 %v232
      %v888 = vunpack.c.l.b16 %v233
      %v889 = vunpack.c.l.b16 %v235
      %v890 = vunpack.c.l.b16 %v236
      %v891 = vunpack.c.l.b16 %v238
      %v892 = vunpack.c.l.b16 %v239
      %v893 = vunpack.c.l.b16 %v241
      %v894 = vunpack.c.l.b16 %v242
      %v895 = vunpack.c.l.b16 %v244
      %v896 = vunpack.c.l.b16 %v245
      %v897 = vpack.c.b16 %v866, %v865
      %v898 = vpack.c.b16 %v868, %v867
      %v899 = vpack.c.b16 %v870, %v869
      %v900 = vpack.c.b16 %v872, %v871
      %v901 = vpack.c.b16 %v874, %v873
      %v902 = vpack.c.b16 %v876, %v875
      %v903 = vpack.c.b16 %v878, %v877
      %v904 = vpack.c.b16 %v880, %v879
      %v905 = vpack.c.b16 %v882, %v881
      %v906 = vpack.c.b16 %v884, %v883
      %v907 = vpack.c.b16 %v886, %v885
      %v908 = vpack.c.b16 %v888, %v887
      %v909 = vpack.c.b16 %v890, %v889
      %v910 = vpack.c.b16 %v892, %v891
      %v911 = vpack.c.b16 %v894, %v893
      %v912 = vpack.c.b16 %v896, %v895
      %v914 = vsel %vm691, %v897, 0
      %v917 = vsel %vm691, %v898, 0
      %v920 = vsel %vm691, %v899, 0
      %v923 = vsel %vm691, %v900, 0
      %v926 = vsel %vm691, %v901, 0
      %v929 = vsel %vm691, %v902, 0
      %v932 = vsel %vm691, %v903, 0
      %v935 = vsel %vm691, %v904, 0
      %v938 = vsel %vm691, %v905, 0
      %v941 = vsel %vm691, %v906, 0
      %v944 = vsel %vm691, %v907, 0
      %v947 = vsel %vm691, %v908, 0
      %v950 = vsel %vm691, %v909, 0
      %v953 = vsel %vm691, %v910, 0
      %v956 = vsel %vm691, %v911, 0
      %v959 = vsel %vm691, %v912, 0
      %v962 = vsel %vm740, %v253, 0
      %964 = vmatpush.bf16.msra.mxu0 0
      %965 = vmatpush.bf16.msra.mxu0 0
      %966 = vmatpush.bf16.msra.mxu0 0
      %967 = vmatpush.bf16.msra.mxu0 0
      %968 = vmatpush.bf16.msra.mxu0 0
      %969 = vmatpush.bf16.msra.mxu0 0
      %970 = vmatpush.bf16.msra.mxu0 0
      %971 = vmatpush.bf16.msra.mxu0 %v962
      %972 = vmatmul.bf16.gmra.mxu0 %v914
      %v973 = vpop.f32.mrf.mxu0
      %v974 = vadd.f32 %v754, %v973
      %v975 = vpop.f32.mrf.mxu0
      %v976 = vadd.f32 %v756, %v975
      %977 = vmatmul.bf16.gmra.mxu0 %v917
      %v978 = vpop.f32.mrf.mxu0
      %v979 = vadd.f32 %v759, %v978
      %v980 = vpop.f32.mrf.mxu0
      %v981 = vadd.f32 %v761, %v980
      %982 = vmatmul.bf16.gmra.mxu0 %v920
      %v983 = vpop.f32.mrf.mxu0
      %v984 = vadd.f32 %v764, %v983
      %v985 = vpop.f32.mrf.mxu0
      %v986 = vadd.f32 %v766, %v985
      %987 = vmatmul.bf16.gmra.mxu0 %v923
      %v988 = vpop.f32.mrf.mxu0
      %v989 = vadd.f32 %v769, %v988
      %v990 = vpop.f32.mrf.mxu0
      %v991 = vadd.f32 %v771, %v990
      %992 = vmatmul.bf16.gmra.mxu0 %v926
      %v993 = vpop.f32.mrf.mxu0
      %v994 = vadd.f32 %v774, %v993
      %v995 = vpop.f32.mrf.mxu0
      %v996 = vadd.f32 %v776, %v995
      %997 = vmatmul.bf16.gmra.mxu0 %v929
      %v998 = vpop.f32.mrf.mxu0
      %v999 = vadd.f32 %v779, %v998
      %v1000 = vpop.f32.mrf.mxu0
      %v1001 = vadd.f32 %v781, %v1000
      %1002 = vmatmul.bf16.gmra.mxu0 %v932
      %v1003 = vpop.f32.mrf.mxu0
      %v1004 = vadd.f32 %v784, %v1003
      %v1005 = vpop.f32.mrf.mxu0
      %v1006 = vadd.f32 %v786, %v1005
      %1007 = vmatmul.bf16.gmra.mxu0 %v935
      %v1008 = vpop.f32.mrf.mxu0
      %v1009 = vadd.f32 %v789, %v1008
      %v1010 = vpop.f32.mrf.mxu0
      %v1011 = vadd.f32 %v791, %v1010
      %1012 = vmatmul.bf16.gmra.mxu0 %v938
      %v1013 = vpop.f32.mrf.mxu0
      %v1014 = vadd.f32 %v794, %v1013
      %v1015 = vpop.f32.mrf.mxu0
      %v1016 = vadd.f32 %v796, %v1015
      %1017 = vmatmul.bf16.gmra.mxu0 %v941
      %v1018 = vpop.f32.mrf.mxu0
      %v1019 = vadd.f32 %v799, %v1018
      %v1020 = vpop.f32.mrf.mxu0
      %v1021 = vadd.f32 %v801, %v1020
      %1022 = vmatmul.bf16.gmra.mxu0 %v944
      %v1023 = vpop.f32.mrf.mxu0
      %v1024 = vadd.f32 %v804, %v1023
      %v1025 = vpop.f32.mrf.mxu0
      %v1026 = vadd.f32 %v806, %v1025
      %1027 = vmatmul.bf16.gmra.mxu0 %v947
      %v1028 = vpop.f32.mrf.mxu0
      %v1029 = vadd.f32 %v809, %v1028
      %v1030 = vpop.f32.mrf.mxu0
      %v1031 = vadd.f32 %v811, %v1030
      %1032 = vmatmul.bf16.gmra.mxu0 %v950
      %v1033 = vpop.f32.mrf.mxu0
      %v1034 = vadd.f32 %v814, %v1033
      %v1035 = vpop.f32.mrf.mxu0
      %v1036 = vadd.f32 %v816, %v1035
      %1037 = vmatmul.bf16.gmra.mxu0 %v953
      %v1038 = vpop.f32.mrf.mxu0
      %v1039 = vadd.f32 %v819, %v1038
      %v1040 = vpop.f32.mrf.mxu0
      %v1041 = vadd.f32 %v821, %v1040
      %1042 = vmatmul.bf16.gmra.mxu0 %v956
      %v1043 = vpop.f32.mrf.mxu0
      %v1044 = vadd.f32 %v824, %v1043
      %v1045 = vpop.f32.mrf.mxu0
      %v1046 = vadd.f32 %v826, %v1045
      %1047 = vmatmul.bf16.gmra.mxu0 %v959
      %v1048 = vpop.f32.mrf.mxu0
      %v1049 = vadd.f32 %v829, %v1048
      %v1050 = vpop.f32.mrf.mxu0
      %v1051 = vadd.f32 %v831, %v1050
      %1052 = vdwg.mxu0
      %vm1069 = vcmask 1042432
      %vm1070 = vcmask 1046532
      %vm1071 = vmor %vm1069, %vm1070
      %v1072 = vrot.slane %v199, 5
      %v1073 = vrot.slane %v1072, 4
      %v1074 = vrot.slane %v200, 5
      %v1075 = vsel %vm1071, %v1073, %v1074
      %v1076 = vrot.slane %v1074, 4
      %v1077 = vrot.slane %v201, 5
      %v1078 = vsel %vm1071, %v1076, %v1077
      %v1079 = vrot.slane %v202, 5
      %v1080 = vrot.slane %v1079, 4
      %v1081 = vrot.slane %v203, 5
      %v1082 = vsel %vm1071, %v1080, %v1081
      %v1083 = vrot.slane %v1081, 4
      %v1084 = vrot.slane %v204, 5
      %v1085 = vsel %vm1071, %v1083, %v1084
      %v1086 = vrot.slane %v205, 5
      %v1087 = vrot.slane %v1086, 4
      %v1088 = vrot.slane %v206, 5
      %v1089 = vsel %vm1071, %v1087, %v1088
      %v1090 = vrot.slane %v1088, 4
      %v1091 = vrot.slane %v207, 5
      %v1092 = vsel %vm1071, %v1090, %v1091
      %v1093 = vrot.slane %v208, 5
      %v1094 = vrot.slane %v1093, 4
      %v1095 = vrot.slane %v209, 5
      %v1096 = vsel %vm1071, %v1094, %v1095
      %v1097 = vrot.slane %v1095, 4
      %v1098 = vrot.slane %v210, 5
      %v1099 = vsel %vm1071, %v1097, %v1098
      %v1100 = vrot.slane %v211, 5
      %v1101 = vrot.slane %v1100, 4
      %v1102 = vrot.slane %v212, 5
      %v1103 = vsel %vm1071, %v1101, %v1102
      %v1104 = vrot.slane %v1102, 4
      %v1105 = vrot.slane %v213, 5
      %v1106 = vsel %vm1071, %v1104, %v1105
      %v1107 = vrot.slane %v214, 5
      %v1108 = vrot.slane %v1107, 4
      %v1109 = vrot.slane %v215, 5
      %v1110 = vsel %vm1071, %v1108, %v1109
      %v1111 = vrot.slane %v1109, 4
      %v1112 = vrot.slane %v216, 5
      %v1113 = vsel %vm1071, %v1111, %v1112
      %v1114 = vrot.slane %v217, 5
      %v1115 = vrot.slane %v1114, 4
      %v1116 = vrot.slane %v218, 5
      %v1117 = vsel %vm1071, %v1115, %v1116
      %v1118 = vrot.slane %v1116, 4
      %v1119 = vrot.slane %v219, 5
      %v1120 = vsel %vm1071, %v1118, %v1119
      %v1121 = vrot.slane %v220, 5
      %v1122 = vrot.slane %v1121, 4
      %v1123 = vrot.slane %v221, 5
      %v1124 = vsel %vm1071, %v1122, %v1123
      %v1125 = vrot.slane %v1123, 4
      %v1126 = vrot.slane %v222, 5
      %v1127 = vsel %vm1071, %v1125, %v1126
      %v1128 = vrot.slane %v223, 5
      %v1129 = vrot.slane %v1128, 4
      %v1130 = vrot.slane %v224, 5
      %v1131 = vsel %vm1071, %v1129, %v1130
      %v1132 = vrot.slane %v1130, 4
      %v1133 = vrot.slane %v225, 5
      %v1134 = vsel %vm1071, %v1132, %v1133
      %v1135 = vrot.slane %v226, 5
      %v1136 = vrot.slane %v1135, 4
      %v1137 = vrot.slane %v227, 5
      %v1138 = vsel %vm1071, %v1136, %v1137
      %v1139 = vrot.slane %v1137, 4
      %v1140 = vrot.slane %v228, 5
      %v1141 = vsel %vm1071, %v1139, %v1140
      %v1142 = vrot.slane %v229, 5
      %v1143 = vrot.slane %v1142, 4
      %v1144 = vrot.slane %v230, 5
      %v1145 = vsel %vm1071, %v1143, %v1144
      %v1146 = vrot.slane %v1144, 4
      %v1147 = vrot.slane %v231, 5
      %v1148 = vsel %vm1071, %v1146, %v1147
      %v1149 = vrot.slane %v232, 5
      %v1150 = vrot.slane %v1149, 4
      %v1151 = vrot.slane %v233, 5
      %v1152 = vsel %vm1071, %v1150, %v1151
      %v1153 = vrot.slane %v1151, 4
      %v1154 = vrot.slane %v234, 5
      %v1155 = vsel %vm1071, %v1153, %v1154
      %v1156 = vrot.slane %v235, 5
      %v1157 = vrot.slane %v1156, 4
      %v1158 = vrot.slane %v236, 5
      %v1159 = vsel %vm1071, %v1157, %v1158
      %v1160 = vrot.slane %v1158, 4
      %v1161 = vrot.slane %v237, 5
      %v1162 = vsel %vm1071, %v1160, %v1161
      %v1163 = vrot.slane %v238, 5
      %v1164 = vrot.slane %v1163, 4
      %v1165 = vrot.slane %v239, 5
      %v1166 = vsel %vm1071, %v1164, %v1165
      %v1167 = vrot.slane %v1165, 4
      %v1168 = vrot.slane %v240, 5
      %v1169 = vsel %vm1071, %v1167, %v1168
      %v1170 = vrot.slane %v241, 5
      %v1171 = vrot.slane %v1170, 4
      %v1172 = vrot.slane %v242, 5
      %v1173 = vsel %vm1071, %v1171, %v1172
      %v1174 = vrot.slane %v1172, 4
      %v1175 = vrot.slane %v243, 5
      %v1176 = vsel %vm1071, %v1174, %v1175
      %v1177 = vrot.slane %v244, 5
      %v1178 = vrot.slane %v1177, 4
      %v1179 = vrot.slane %v245, 5
      %v1180 = vsel %vm1071, %v1178, %v1179
      %v1181 = vrot.slane %v1179, 4
      %v1182 = vrot.slane %v246, 5
      %v1183 = vsel %vm1071, %v1181, %v1182
      %s1184 = scalar_lea.vmem %s1, 4
      %v1185 = vld [vmem:[%s1184] sm:$0x3]
      %v1186 = vunpack.c.l.b16 %v1075
      %v1187 = vunpack.c.l.b16 %v1078
      %v1188 = vunpack.c.l.b16 %v1082
      %v1189 = vunpack.c.l.b16 %v1085
      %v1190 = vunpack.c.l.b16 %v1089
      %v1191 = vunpack.c.l.b16 %v1092
      %v1192 = vunpack.c.l.b16 %v1096
      %v1193 = vunpack.c.l.b16 %v1099
      %v1194 = vunpack.c.l.b16 %v1103
      %v1195 = vunpack.c.l.b16 %v1106
      %v1196 = vunpack.c.l.b16 %v1110
      %v1197 = vunpack.c.l.b16 %v1113
      %v1198 = vunpack.c.l.b16 %v1117
      %v1199 = vunpack.c.l.b16 %v1120
      %v1200 = vunpack.c.l.b16 %v1124
      %v1201 = vunpack.c.l.b16 %v1127
      %v1202 = vunpack.c.l.b16 %v1131
      %v1203 = vunpack.c.l.b16 %v1134
      %v1204 = vunpack.c.l.b16 %v1138
      %v1205 = vunpack.c.l.b16 %v1141
      %v1206 = vunpack.c.l.b16 %v1145
      %v1207 = vunpack.c.l.b16 %v1148
      %v1208 = vunpack.c.l.b16 %v1152
      %v1209 = vunpack.c.l.b16 %v1155
      %v1210 = vunpack.c.l.b16 %v1159
      %v1211 = vunpack.c.l.b16 %v1162
      %v1212 = vunpack.c.l.b16 %v1166
      %v1213 = vunpack.c.l.b16 %v1169
      %v1214 = vunpack.c.l.b16 %v1173
      %v1215 = vunpack.c.l.b16 %v1176
      %v1216 = vunpack.c.l.b16 %v1180
      %v1217 = vunpack.c.l.b16 %v1183
      %v1218 = vpack.c.b16 %v1187, %v1186
      %v1219 = vpack.c.b16 %v1189, %v1188
      %v1220 = vpack.c.b16 %v1191, %v1190
      %v1221 = vpack.c.b16 %v1193, %v1192
      %v1222 = vpack.c.b16 %v1195, %v1194
      %v1223 = vpack.c.b16 %v1197, %v1196
      %v1224 = vpack.c.b16 %v1199, %v1198
      %v1225 = vpack.c.b16 %v1201, %v1200
      %v1226 = vpack.c.b16 %v1203, %v1202
      %v1227 = vpack.c.b16 %v1205, %v1204
      %v1228 = vpack.c.b16 %v1207, %v1206
      %v1229 = vpack.c.b16 %v1209, %v1208
      %v1230 = vpack.c.b16 %v1211, %v1210
      %v1231 = vpack.c.b16 %v1213, %v1212
      %v1232 = vpack.c.b16 %v1215, %v1214
      %v1233 = vpack.c.b16 %v1217, %v1216
      %v1235 = vsel %vm691, %v1218, 0
      %v1238 = vsel %vm691, %v1219, 0
      %v1241 = vsel %vm691, %v1220, 0
      %v1244 = vsel %vm691, %v1221, 0
      %v1247 = vsel %vm691, %v1222, 0
      %v1250 = vsel %vm691, %v1223, 0
      %v1253 = vsel %vm691, %v1224, 0
      %v1256 = vsel %vm691, %v1225, 0
      %v1259 = vsel %vm691, %v1226, 0
      %v1262 = vsel %vm691, %v1227, 0
      %v1265 = vsel %vm691, %v1228, 0
      %v1268 = vsel %vm691, %v1229, 0
      %v1271 = vsel %vm691, %v1230, 0
      %v1274 = vsel %vm691, %v1231, 0
      %v1277 = vsel %vm691, %v1232, 0
      %v1280 = vsel %vm691, %v1233, 0
      %v1283 = vsel %vm740, %v1185, 0
      %1285 = vmatpush.bf16.msra.mxu0 0
      %1286 = vmatpush.bf16.msra.mxu0 0
      %1287 = vmatpush.bf16.msra.mxu0 0
      %1288 = vmatpush.bf16.msra.mxu0 0
      %1289 = vmatpush.bf16.msra.mxu0 0
      %1290 = vmatpush.bf16.msra.mxu0 0
      %1291 = vmatpush.bf16.msra.mxu0 0
      %1292 = vmatpush.bf16.msra.mxu0 %v1283
      %1293 = vmatmul.bf16.gmra.mxu0 %v1235
      %v1294 = vpop.f32.mrf.mxu0
      %v1295 = vadd.f32 0.0, %v1294
      %v1296 = vpop.f32.mrf.mxu0
      %v1297 = vadd.f32 0.0, %v1296
      %1298 = vmatmul.bf16.gmra.mxu0 %v1238
      %v1299 = vpop.f32.mrf.mxu0
      %v1300 = vadd.f32 0.0, %v1299
      %v1301 = vpop.f32.mrf.mxu0
      %v1302 = vadd.f32 0.0, %v1301
      %1303 = vmatmul.bf16.gmra.mxu0 %v1241
      %v1304 = vpop.f32.mrf.mxu0
      %v1305 = vadd.f32 0.0, %v1304
      %v1306 = vpop.f32.mrf.mxu0
      %v1307 = vadd.f32 0.0, %v1306
      %1308 = vmatmul.bf16.gmra.mxu0 %v1244
      %v1309 = vpop.f32.mrf.mxu0
      %v1310 = vadd.f32 0.0, %v1309
      %v1311 = vpop.f32.mrf.mxu0
      %v1312 = vadd.f32 0.0, %v1311
      %1313 = vmatmul.bf16.gmra.mxu0 %v1247
      %v1314 = vpop.f32.mrf.mxu0
      %v1315 = vadd.f32 0.0, %v1314
      %v1316 = vpop.f32.mrf.mxu0
      %v1317 = vadd.f32 0.0, %v1316
      %1318 = vmatmul.bf16.gmra.mxu0 %v1250
      %v1319 = vpop.f32.mrf.mxu0
      %v1320 = vadd.f32 0.0, %v1319
      %v1321 = vpop.f32.mrf.mxu0
      %v1322 = vadd.f32 0.0, %v1321
      %1323 = vmatmul.bf16.gmra.mxu0 %v1253
      %v1324 = vpop.f32.mrf.mxu0
      %v1325 = vadd.f32 0.0, %v1324
      %v1326 = vpop.f32.mrf.mxu0
      %v1327 = vadd.f32 0.0, %v1326
      %1328 = vmatmul.bf16.gmra.mxu0 %v1256
      %v1329 = vpop.f32.mrf.mxu0
      %v1330 = vadd.f32 0.0, %v1329
      %v1331 = vpop.f32.mrf.mxu0
      %v1332 = vadd.f32 0.0, %v1331
      %1333 = vmatmul.bf16.gmra.mxu0 %v1259
      %v1334 = vpop.f32.mrf.mxu0
      %v1335 = vadd.f32 0.0, %v1334
      %v1336 = vpop.f32.mrf.mxu0
      %v1337 = vadd.f32 0.0, %v1336
      %1338 = vmatmul.bf16.gmra.mxu0 %v1262
      %v1339 = vpop.f32.mrf.mxu0
      %v1340 = vadd.f32 0.0, %v1339
      %v1341 = vpop.f32.mrf.mxu0
      %v1342 = vadd.f32 0.0, %v1341
      %1343 = vmatmul.bf16.gmra.mxu0 %v1265
      %v1344 = vpop.f32.mrf.mxu0
      %v1345 = vadd.f32 0.0, %v1344
      %v1346 = vpop.f32.mrf.mxu0
      %v1347 = vadd.f32 0.0, %v1346
      %1348 = vmatmul.bf16.gmra.mxu0 %v1268
      %v1349 = vpop.f32.mrf.mxu0
      %v1350 = vadd.f32 0.0, %v1349
      %v1351 = vpop.f32.mrf.mxu0
      %v1352 = vadd.f32 0.0, %v1351
      %1353 = vmatmul.bf16.gmra.mxu0 %v1271
      %v1354 = vpop.f32.mrf.mxu0
      %v1355 = vadd.f32 0.0, %v1354
      %v1356 = vpop.f32.mrf.mxu0
      %v1357 = vadd.f32 0.0, %v1356
      %1358 = vmatmul.bf16.gmra.mxu0 %v1274
      %v1359 = vpop.f32.mrf.mxu0
      %v1360 = vadd.f32 0.0, %v1359
      %v1361 = vpop.f32.mrf.mxu0
      %v1362 = vadd.f32 0.0, %v1361
      %1363 = vmatmul.bf16.gmra.mxu0 %v1277
      %v1364 = vpop.f32.mrf.mxu0
      %v1365 = vadd.f32 0.0, %v1364
      %v1366 = vpop.f32.mrf.mxu0
      %v1367 = vadd.f32 0.0, %v1366
      %1368 = vmatmul.bf16.gmra.mxu0 %v1280
      %v1369 = vpop.f32.mrf.mxu0
      %v1370 = vadd.f32 0.0, %v1369
      %v1371 = vpop.f32.mrf.mxu0
      %v1372 = vadd.f32 0.0, %v1371
      %1373 = vdwg.mxu0
      %v1374 = vadd.f32 %v974, %v1295
      %v1375 = vadd.f32 %v976, %v1297
      %v1376 = vadd.f32 %v979, %v1300
      %v1377 = vadd.f32 %v981, %v1302
      %v1378 = vadd.f32 %v984, %v1305
      %v1379 = vadd.f32 %v986, %v1307
      %v1380 = vadd.f32 %v989, %v1310
      %v1381 = vadd.f32 %v991, %v1312
      %v1382 = vadd.f32 %v994, %v1315
      %v1383 = vadd.f32 %v996, %v1317
      %v1384 = vadd.f32 %v999, %v1320
      %v1385 = vadd.f32 %v1001, %v1322
      %v1386 = vadd.f32 %v1004, %v1325
      %v1387 = vadd.f32 %v1006, %v1327
      %v1388 = vadd.f32 %v1009, %v1330
      %v1389 = vadd.f32 %v1011, %v1332
      %v1390 = vadd.f32 %v1014, %v1335
      %v1391 = vadd.f32 %v1016, %v1337
      %v1392 = vadd.f32 %v1019, %v1340
      %v1393 = vadd.f32 %v1021, %v1342
      %v1394 = vadd.f32 %v1024, %v1345
      %v1395 = vadd.f32 %v1026, %v1347
      %v1396 = vadd.f32 %v1029, %v1350
      %v1397 = vadd.f32 %v1031, %v1352
      %v1398 = vadd.f32 %v1034, %v1355
      %v1399 = vadd.f32 %v1036, %v1357
      %v1400 = vadd.f32 %v1039, %v1360
      %v1401 = vadd.f32 %v1041, %v1362
      %v1402 = vadd.f32 %v1044, %v1365
      %v1403 = vadd.f32 %v1046, %v1367
      %v1404 = vadd.f32 %v1049, %v1370
      %v1405 = vadd.f32 %v1051, %v1372
      %s1406 = scalar_lea.vmem %s1, 6
      %v1407 = vld [vmem:[%s1406] sm:$0x3]
      %v1410 = vunpack.c.l.b16 %v247
      %v1411 = vunpack.c.l.b16 %v248
      %v1412 = vpack.c.b16 %v1411, %v1410
      %v1414 = vsel %vm691, %v1412, 0
      %v1417 = vsel %vm740, %v1407, 0
      %1419 = vmatpush.bf16.msra.mxu0 0
      %1420 = vmatpush.bf16.msra.mxu0 0
      %1421 = vmatpush.bf16.msra.mxu0 0
      %1422 = vmatpush.bf16.msra.mxu0 0
      %1423 = vmatpush.bf16.msra.mxu0 0
      %1424 = vmatpush.bf16.msra.mxu0 0
      %1425 = vmatpush.bf16.msra.mxu0 0
      %1426 = vmatpush.bf16.msra.mxu0 %v1417
      %1427 = vmatmul.bf16.gmra.mxu0 %v917
      %v1428 = vpop.f32.mrf.mxu0
      %v1429 = vadd.f32 0.0, %v1428
      %v1430 = vpop.f32.mrf.mxu0
      %v1431 = vadd.f32 0.0, %v1430
      %1432 = vmatmul.bf16.gmra.mxu0 %v920
      %v1433 = vpop.f32.mrf.mxu0
      %v1434 = vadd.f32 0.0, %v1433
      %v1435 = vpop.f32.mrf.mxu0
      %v1436 = vadd.f32 0.0, %v1435
      %1437 = vmatmul.bf16.gmra.mxu0 %v923
      %v1438 = vpop.f32.mrf.mxu0
      %v1439 = vadd.f32 0.0, %v1438
      %v1440 = vpop.f32.mrf.mxu0
      %v1441 = vadd.f32 0.0, %v1440
      %1442 = vmatmul.bf16.gmra.mxu0 %v926
      %v1443 = vpop.f32.mrf.mxu0
      %v1444 = vadd.f32 0.0, %v1443
      %v1445 = vpop.f32.mrf.mxu0
      %v1446 = vadd.f32 0.0, %v1445
      %1447 = vmatmul.bf16.gmra.mxu0 %v929
      %v1448 = vpop.f32.mrf.mxu0
      %v1449 = vadd.f32 0.0, %v1448
      %v1450 = vpop.f32.mrf.mxu0
      %v1451 = vadd.f32 0.0, %v1450
      %1452 = vmatmul.bf16.gmra.mxu0 %v932
      %v1453 = vpop.f32.mrf.mxu0
      %v1454 = vadd.f32 0.0, %v1453
      %v1455 = vpop.f32.mrf.mxu0
      %v1456 = vadd.f32 0.0, %v1455
      %1457 = vmatmul.bf16.gmra.mxu0 %v935
      %v1458 = vpop.f32.mrf.mxu0
      %v1459 = vadd.f32 0.0, %v1458
      %v1460 = vpop.f32.mrf.mxu0
      %v1461 = vadd.f32 0.0, %v1460
      %1462 = vmatmul.bf16.gmra.mxu0 %v938
      %v1463 = vpop.f32.mrf.mxu0
      %v1464 = vadd.f32 0.0, %v1463
      %v1465 = vpop.f32.mrf.mxu0
      %v1466 = vadd.f32 0.0, %v1465
      %1467 = vmatmul.bf16.gmra.mxu0 %v941
      %v1468 = vpop.f32.mrf.mxu0
      %v1469 = vadd.f32 0.0, %v1468
      %v1470 = vpop.f32.mrf.mxu0
      %v1471 = vadd.f32 0.0, %v1470
      %1472 = vmatmul.bf16.gmra.mxu0 %v944
      %v1473 = vpop.f32.mrf.mxu0
      %v1474 = vadd.f32 0.0, %v1473
      %v1475 = vpop.f32.mrf.mxu0
      %v1476 = vadd.f32 0.0, %v1475
      %1477 = vmatmul.bf16.gmra.mxu0 %v947
      %v1478 = vpop.f32.mrf.mxu0
      %v1479 = vadd.f32 0.0, %v1478
      %v1480 = vpop.f32.mrf.mxu0
      %v1481 = vadd.f32 0.0, %v1480
      %1482 = vmatmul.bf16.gmra.mxu0 %v950
      %v1483 = vpop.f32.mrf.mxu0
      %v1484 = vadd.f32 0.0, %v1483
      %v1485 = vpop.f32.mrf.mxu0
      %v1486 = vadd.f32 0.0, %v1485
      %1487 = vmatmul.bf16.gmra.mxu0 %v953
      %v1488 = vpop.f32.mrf.mxu0
      %v1489 = vadd.f32 0.0, %v1488
      %v1490 = vpop.f32.mrf.mxu0
      %v1491 = vadd.f32 0.0, %v1490
      %1492 = vmatmul.bf16.gmra.mxu0 %v956
      %v1493 = vpop.f32.mrf.mxu0
      %v1494 = vadd.f32 0.0, %v1493
      %v1495 = vpop.f32.mrf.mxu0
      %v1496 = vadd.f32 0.0, %v1495
      %1497 = vmatmul.bf16.gmra.mxu0 %v959
      %v1498 = vpop.f32.mrf.mxu0
      %v1499 = vadd.f32 0.0, %v1498
      %v1500 = vpop.f32.mrf.mxu0
      %v1501 = vadd.f32 0.0, %v1500
      %1502 = vmatmul.bf16.gmra.mxu0 %v1414
      %v1503 = vpop.f32.mrf.mxu0
      %v1504 = vadd.f32 0.0, %v1503
      %v1505 = vpop.f32.mrf.mxu0
      %v1506 = vadd.f32 0.0, %v1505
      %1507 = vdwg.mxu0
      %v1508 = vadd.f32 %v1374, %v1429
      %v1509 = vadd.f32 %v1375, %v1431
      %v1510 = vadd.f32 %v1376, %v1434
      %v1511 = vadd.f32 %v1377, %v1436
      %v1512 = vadd.f32 %v1378, %v1439
      %v1513 = vadd.f32 %v1379, %v1441
      %v1514 = vadd.f32 %v1380, %v1444
      %v1515 = vadd.f32 %v1381, %v1446
      %v1516 = vadd.f32 %v1382, %v1449
      %v1517 = vadd.f32 %v1383, %v1451
      %v1518 = vadd.f32 %v1384, %v1454
      %v1519 = vadd.f32 %v1385, %v1456
      %v1520 = vadd.f32 %v1386, %v1459
      %v1521 = vadd.f32 %v1387, %v1461
      %v1522 = vadd.f32 %v1388, %v1464
      %v1523 = vadd.f32 %v1389, %v1466
      %v1524 = vadd.f32 %v1390, %v1469
      %v1525 = vadd.f32 %v1391, %v1471
      %v1526 = vadd.f32 %v1392, %v1474
      %v1527 = vadd.f32 %v1393, %v1476
      %v1528 = vadd.f32 %v1394, %v1479
      %v1529 = vadd.f32 %v1395, %v1481
      %v1530 = vadd.f32 %v1396, %v1484
      %v1531 = vadd.f32 %v1397, %v1486
      %v1532 = vadd.f32 %v1398, %v1489
      %v1533 = vadd.f32 %v1399, %v1491
      %v1534 = vadd.f32 %v1400, %v1494
      %v1535 = vadd.f32 %v1401, %v1496
      %v1536 = vadd.f32 %v1402, %v1499
      %v1537 = vadd.f32 %v1403, %v1501
      %v1538 = vadd.f32 %v1404, %v1504
      %v1539 = vadd.f32 %v1405, %v1506
      %v1541 = vshrl.u32 %v247, 16
      %v1543 = vrot.slane %v1541, 4
      %v1544 = vshll.u32 %v247, 16
      %v1546 = vrot.slane %v1544, 5
      %v1547 = vor.u32 %v1543, %v1546
      %v1548 = vrot.slane %v1547, 4
      %v1550 = vshll.u32 %v248, 16
      %v1552 = vrot.slane %v1550, 5
      %v1553 = vsel %vm256, %v1548, %v1552
      %v1554 = vshrl.u32 %v248, 16
      %v1556 = vrot.slane %v1554, 4
      %v1557 = vor.u32 %v1556, %v1552
      %v1558 = vrot.slane %v1557, 4
      %v1560 = vshll.u32 %v249, 16
      %v1562 = vrot.slane %v1560, 5
      %v1563 = vsel %vm256, %v1558, %v1562
      %s1564 = scalar_lea.vmem %s1, 8
      %v1565 = vld [vmem:[%s1564] sm:$0x3]
      %v1566 = vunpack.c.l.b16 %v1553
      %v1567 = vunpack.c.l.b16 %v1563
      %v1568 = vpack.c.b16 %v1567, %v1566
      %v1570 = vsel %vm691, %v1568, 0
      %v1573 = vsel %vm740, %v1565, 0
      %1575 = vmatpush.bf16.msra.mxu0 0
      %1576 = vmatpush.bf16.msra.mxu0 0
      %1577 = vmatpush.bf16.msra.mxu0 0
      %1578 = vmatpush.bf16.msra.mxu0 0
      %1579 = vmatpush.bf16.msra.mxu0 0
      %1580 = vmatpush.bf16.msra.mxu0 0
      %1581 = vmatpush.bf16.msra.mxu0 0
      %1582 = vmatpush.bf16.msra.mxu0 %v1573
      %1583 = vmatmul.bf16.gmra.mxu0 %v696
      %v1584 = vpop.f32.mrf.mxu0
      %v1585 = vadd.f32 0.0, %v1584
      %v1586 = vpop.f32.mrf.mxu0
      %v1587 = vadd.f32 0.0, %v1586
      %1588 = vmatmul.bf16.gmra.mxu0 %v699
      %v1589 = vpop.f32.mrf.mxu0
      %v1590 = vadd.f32 0.0, %v1589
      %v1591 = vpop.f32.mrf.mxu0
      %v1592 = vadd.f32 0.0, %v1591
      %1593 = vmatmul.bf16.gmra.mxu0 %v702
      %v1594 = vpop.f32.mrf.mxu0
      %v1595 = vadd.f32 0.0, %v1594
      %v1596 = vpop.f32.mrf.mxu0
      %v1597 = vadd.f32 0.0, %v1596
      %1598 = vmatmul.bf16.gmra.mxu0 %v705
      %v1599 = vpop.f32.mrf.mxu0
      %v1600 = vadd.f32 0.0, %v1599
      %v1601 = vpop.f32.mrf.mxu0
      %v1602 = vadd.f32 0.0, %v1601
      %1603 = vmatmul.bf16.gmra.mxu0 %v708
      %v1604 = vpop.f32.mrf.mxu0
      %v1605 = vadd.f32 0.0, %v1604
      %v1606 = vpop.f32.mrf.mxu0
      %v1607 = vadd.f32 0.0, %v1606
      %1608 = vmatmul.bf16.gmra.mxu0 %v711
      %v1609 = vpop.f32.mrf.mxu0
      %v1610 = vadd.f32 0.0, %v1609
      %v1611 = vpop.f32.mrf.mxu0
      %v1612 = vadd.f32 0.0, %v1611
      %1613 = vmatmul.bf16.gmra.mxu0 %v714
      %v1614 = vpop.f32.mrf.mxu0
      %v1615 = vadd.f32 0.0, %v1614
      %v1616 = vpop.f32.mrf.mxu0
      %v1617 = vadd.f32 0.0, %v1616
      %1618 = vmatmul.bf16.gmra.mxu0 %v717
      %v1619 = vpop.f32.mrf.mxu0
      %v1620 = vadd.f32 0.0, %v1619
      %v1621 = vpop.f32.mrf.mxu0
      %v1622 = vadd.f32 0.0, %v1621
      %1623 = vmatmul.bf16.gmra.mxu0 %v720
      %v1624 = vpop.f32.mrf.mxu0
      %v1625 = vadd.f32 0.0, %v1624
      %v1626 = vpop.f32.mrf.mxu0
      %v1627 = vadd.f32 0.0, %v1626
      %1628 = vmatmul.bf16.gmra.mxu0 %v723
      %v1629 = vpop.f32.mrf.mxu0
      %v1630 = vadd.f32 0.0, %v1629
      %v1631 = vpop.f32.mrf.mxu0
      %v1632 = vadd.f32 0.0, %v1631
      %1633 = vmatmul.bf16.gmra.mxu0 %v726
      %v1634 = vpop.f32.mrf.mxu0
      %v1635 = vadd.f32 0.0, %v1634
      %v1636 = vpop.f32.mrf.mxu0
      %v1637 = vadd.f32 0.0, %v1636
      %1638 = vmatmul.bf16.gmra.mxu0 %v729
      %v1639 = vpop.f32.mrf.mxu0
      %v1640 = vadd.f32 0.0, %v1639
      %v1641 = vpop.f32.mrf.mxu0
      %v1642 = vadd.f32 0.0, %v1641
      %1643 = vmatmul.bf16.gmra.mxu0 %v732
      %v1644 = vpop.f32.mrf.mxu0
      %v1645 = vadd.f32 0.0, %v1644
      %v1646 = vpop.f32.mrf.mxu0
      %v1647 = vadd.f32 0.0, %v1646
      %1648 = vmatmul.bf16.gmra.mxu0 %v735
      %v1649 = vpop.f32.mrf.mxu0
      %v1650 = vadd.f32 0.0, %v1649
      %v1651 = vpop.f32.mrf.mxu0
      %v1652 = vadd.f32 0.0, %v1651
      %1653 = vmatmul.bf16.gmra.mxu0 %v738
      %v1654 = vpop.f32.mrf.mxu0
      %v1655 = vadd.f32 0.0, %v1654
      %v1656 = vpop.f32.mrf.mxu0
      %v1657 = vadd.f32 0.0, %v1656
      %1658 = vmatmul.bf16.gmra.mxu0 %v1570
      %v1659 = vpop.f32.mrf.mxu0
      %v1660 = vadd.f32 0.0, %v1659
      %v1661 = vpop.f32.mrf.mxu0
      %v1662 = vadd.f32 0.0, %v1661
      %1663 = vdwg.mxu0
      %v1664 = vadd.f32 %v1508, %v1585
      %v1665 = vadd.f32 %v1509, %v1587
      %v1666 = vadd.f32 %v1510, %v1590
      %v1667 = vadd.f32 %v1511, %v1592
      %v1668 = vadd.f32 %v1512, %v1595
      %v1669 = vadd.f32 %v1513, %v1597
      %v1670 = vadd.f32 %v1514, %v1600
      %v1671 = vadd.f32 %v1515, %v1602
      %v1672 = vadd.f32 %v1516, %v1605
      %v1673 = vadd.f32 %v1517, %v1607
      %v1674 = vadd.f32 %v1518, %v1610
      %v1675 = vadd.f32 %v1519, %v1612
      %v1676 = vadd.f32 %v1520, %v1615
      %v1677 = vadd.f32 %v1521, %v1617
      %v1678 = vadd.f32 %v1522, %v1620
      %v1679 = vadd.f32 %v1523, %v1622
      %v1680 = vadd.f32 %v1524, %v1625
      %v1681 = vadd.f32 %v1525, %v1627
      %v1682 = vadd.f32 %v1526, %v1630
      %v1683 = vadd.f32 %v1527, %v1632
      %v1684 = vadd.f32 %v1528, %v1635
      %v1685 = vadd.f32 %v1529, %v1637
      %v1686 = vadd.f32 %v1530, %v1640
      %v1687 = vadd.f32 %v1531, %v1642
      %v1688 = vadd.f32 %v1532, %v1645
      %v1689 = vadd.f32 %v1533, %v1647
      %v1690 = vadd.f32 %v1534, %v1650
      %v1691 = vadd.f32 %v1535, %v1652
      %v1692 = vadd.f32 %v1536, %v1655
      %v1693 = vadd.f32 %v1537, %v1657
      %v1694 = vadd.f32 %v1538, %v1660
      %v1695 = vadd.f32 %v1539, %v1662
      %v1697 = vrot.slane %v247, 5
      %v1698 = vrot.slane %v1697, 4
      %v1699 = vrot.slane %v248, 5
      %v1700 = vsel %vm1071, %v1698, %v1699
      %v1701 = vrot.slane %v1699, 4
      %v1702 = vrot.slane %v249, 5
      %v1703 = vsel %vm1071, %v1701, %v1702
      %s1704 = scalar_lea.vmem %s1, 10
      %v1705 = vld [vmem:[%s1704] sm:$0x3]
      %v1706 = vunpack.c.l.b16 %v1700
      %v1707 = vunpack.c.l.b16 %v1703
      %v1708 = vpack.c.b16 %v1707, %v1706
      %v1710 = vsel %vm691, %v1708, 0
      %v1713 = vsel %vm740, %v1705, 0
      %1715 = vmatpush.bf16.msra.mxu0 0
      %1716 = vmatpush.bf16.msra.mxu0 0
      %1717 = vmatpush.bf16.msra.mxu0 0
      %1718 = vmatpush.bf16.msra.mxu0 0
      %1719 = vmatpush.bf16.msra.mxu0 0
      %1720 = vmatpush.bf16.msra.mxu0 0
      %1721 = vmatpush.bf16.msra.mxu0 0
      %1722 = vmatpush.bf16.msra.mxu0 %v1713
      %1723 = vmatmul.bf16.gmra.mxu0 %v1238
      %v1724 = vpop.f32.mrf.mxu0
      %v1725 = vadd.f32 0.0, %v1724
      %v1726 = vpop.f32.mrf.mxu0
      %v1727 = vadd.f32 0.0, %v1726
      %1728 = vmatmul.bf16.gmra.mxu0 %v1241
      %v1729 = vpop.f32.mrf.mxu0
      %v1730 = vadd.f32 0.0, %v1729
      %v1731 = vpop.f32.mrf.mxu0
      %v1732 = vadd.f32 0.0, %v1731
      %1733 = vmatmul.bf16.gmra.mxu0 %v1244
      %v1734 = vpop.f32.mrf.mxu0
      %v1735 = vadd.f32 0.0, %v1734
      %v1736 = vpop.f32.mrf.mxu0
      %v1737 = vadd.f32 0.0, %v1736
      %1738 = vmatmul.bf16.gmra.mxu0 %v1247
      %v1739 = vpop.f32.mrf.mxu0
      %v1740 = vadd.f32 0.0, %v1739
      %v1741 = vpop.f32.mrf.mxu0
      %v1742 = vadd.f32 0.0, %v1741
      %1743 = vmatmul.bf16.gmra.mxu0 %v1250
      %v1744 = vpop.f32.mrf.mxu0
      %v1745 = vadd.f32 0.0, %v1744
      %v1746 = vpop.f32.mrf.mxu0
      %v1747 = vadd.f32 0.0, %v1746
      %1748 = vmatmul.bf16.gmra.mxu0 %v1253
      %v1749 = vpop.f32.mrf.mxu0
      %v1750 = vadd.f32 0.0, %v1749
      %v1751 = vpop.f32.mrf.mxu0
      %v1752 = vadd.f32 0.0, %v1751
      %1753 = vmatmul.bf16.gmra.mxu0 %v1256
      %v1754 = vpop.f32.mrf.mxu0
      %v1755 = vadd.f32 0.0, %v1754
      %v1756 = vpop.f32.mrf.mxu0
      %v1757 = vadd.f32 0.0, %v1756
      %1758 = vmatmul.bf16.gmra.mxu0 %v1259
      %v1759 = vpop.f32.mrf.mxu0
      %v1760 = vadd.f32 0.0, %v1759
      %v1761 = vpop.f32.mrf.mxu0
      %v1762 = vadd.f32 0.0, %v1761
      %1763 = vmatmul.bf16.gmra.mxu0 %v1262
      %v1764 = vpop.f32.mrf.mxu0
      %v1765 = vadd.f32 0.0, %v1764
      %v1766 = vpop.f32.mrf.mxu0
      %v1767 = vadd.f32 0.0, %v1766
      %1768 = vmatmul.bf16.gmra.mxu0 %v1265
      %v1769 = vpop.f32.mrf.mxu0
      %v1770 = vadd.f32 0.0, %v1769
      %v1771 = vpop.f32.mrf.mxu0
      %v1772 = vadd.f32 0.0, %v1771
      %1773 = vmatmul.bf16.gmra.mxu0 %v1268
      %v1774 = vpop.f32.mrf.mxu0
      %v1775 = vadd.f32 0.0, %v1774
      %v1776 = vpop.f32.mrf.mxu0
      %v1777 = vadd.f32 0.0, %v1776
      %1778 = vmatmul.bf16.gmra.mxu0 %v1271
      %v1779 = vpop.f32.mrf.mxu0
      %v1780 = vadd.f32 0.0, %v1779
      %v1781 = vpop.f32.mrf.mxu0
      %v1782 = vadd.f32 0.0, %v1781
      %1783 = vmatmul.bf16.gmra.mxu0 %v1274
      %v1784 = vpop.f32.mrf.mxu0
      %v1785 = vadd.f32 0.0, %v1784
      %v1786 = vpop.f32.mrf.mxu0
      %v1787 = vadd.f32 0.0, %v1786
      %1788 = vmatmul.bf16.gmra.mxu0 %v1277
      %v1789 = vpop.f32.mrf.mxu0
      %v1790 = vadd.f32 0.0, %v1789
      %v1791 = vpop.f32.mrf.mxu0
      %v1792 = vadd.f32 0.0, %v1791
      %1793 = vmatmul.bf16.gmra.mxu0 %v1280
      %v1794 = vpop.f32.mrf.mxu0
      %v1795 = vadd.f32 0.0, %v1794
      %v1796 = vpop.f32.mrf.mxu0
      %v1797 = vadd.f32 0.0, %v1796
      %1798 = vmatmul.bf16.gmra.mxu0 %v1710
      %v1799 = vpop.f32.mrf.mxu0
      %v1800 = vadd.f32 0.0, %v1799
      %v1801 = vpop.f32.mrf.mxu0
      %v1802 = vadd.f32 0.0, %v1801
      %1803 = vdwg.mxu0
      %v1804 = vadd.f32 %v1664, %v1725
      %v1805 = vadd.f32 %v1665, %v1727
      %v1806 = vadd.f32 %v1666, %v1730
      %v1807 = vadd.f32 %v1667, %v1732
      %v1808 = vadd.f32 %v1668, %v1735
      %v1809 = vadd.f32 %v1669, %v1737
      %v1810 = vadd.f32 %v1670, %v1740
      %v1811 = vadd.f32 %v1671, %v1742
      %v1812 = vadd.f32 %v1672, %v1745
      %v1813 = vadd.f32 %v1673, %v1747
      %v1814 = vadd.f32 %v1674, %v1750
      %v1815 = vadd.f32 %v1675, %v1752
      %v1816 = vadd.f32 %v1676, %v1755
      %v1817 = vadd.f32 %v1677, %v1757
      %v1818 = vadd.f32 %v1678, %v1760
      %v1819 = vadd.f32 %v1679, %v1762
      %v1820 = vadd.f32 %v1680, %v1765
      %v1821 = vadd.f32 %v1681, %v1767
      %v1822 = vadd.f32 %v1682, %v1770
      %v1823 = vadd.f32 %v1683, %v1772
      %v1824 = vadd.f32 %v1684, %v1775
      %v1825 = vadd.f32 %v1685, %v1777
      %v1826 = vadd.f32 %v1686, %v1780
      %v1827 = vadd.f32 %v1687, %v1782
      %v1828 = vadd.f32 %v1688, %v1785
      %v1829 = vadd.f32 %v1689, %v1787
      %v1830 = vadd.f32 %v1690, %v1790
      %v1831 = vadd.f32 %v1691, %v1792
      %v1832 = vadd.f32 %v1692, %v1795
      %v1833 = vadd.f32 %v1693, %v1797
      %v1834 = vadd.f32 %v1694, %v1800
      %v1835 = vadd.f32 %v1695, %v1802
      %s1836 = scalar_lea.vmem %s1, 12
      %v1837 = vld [vmem:[%s1836] sm:$0x3]
      %v1840 = vunpack.c.l.b16 %v250
      %v1841 = vunpack.c.l.b16 %v251
      %v1842 = vpack.c.b16 %v1841, %v1840
      %v1844 = vsel %vm691, %v1842, 0
      %v1847 = vsel %vm740, %v1837, 0
      %1849 = vmatpush.bf16.msra.mxu0 0
      %1850 = vmatpush.bf16.msra.mxu0 0
      %1851 = vmatpush.bf16.msra.mxu0 0
      %1852 = vmatpush.bf16.msra.mxu0 0
      %1853 = vmatpush.bf16.msra.mxu0 0
      %1854 = vmatpush.bf16.msra.mxu0 0
      %1855 = vmatpush.bf16.msra.mxu0 0
      %1856 = vmatpush.bf16.msra.mxu0 %v1847
      %1857 = vmatmul.bf16.gmra.mxu0 %v920
      %v1858 = vpop.f32.mrf.mxu0
      %v1859 = vadd.f32 0.0, %v1858
      %v1860 = vpop.f32.mrf.mxu0
      %v1861 = vadd.f32 0.0, %v1860
      %1862 = vmatmul.bf16.gmra.mxu0 %v923
      %v1863 = vpop.f32.mrf.mxu0
      %v1864 = vadd.f32 0.0, %v1863
      %v1865 = vpop.f32.mrf.mxu0
      %v1866 = vadd.f32 0.0, %v1865
      %1867 = vmatmul.bf16.gmra.mxu0 %v926
      %v1868 = vpop.f32.mrf.mxu0
      %v1869 = vadd.f32 0.0, %v1868
      %v1870 = vpop.f32.mrf.mxu0
      %v1871 = vadd.f32 0.0, %v1870
      %1872 = vmatmul.bf16.gmra.mxu0 %v929
      %v1873 = vpop.f32.mrf.mxu0
      %v1874 = vadd.f32 0.0, %v1873
      %v1875 = vpop.f32.mrf.mxu0
      %v1876 = vadd.f32 0.0, %v1875
      %1877 = vmatmul.bf16.gmra.mxu0 %v932
      %v1878 = vpop.f32.mrf.mxu0
      %v1879 = vadd.f32 0.0, %v1878
      %v1880 = vpop.f32.mrf.mxu0
      %v1881 = vadd.f32 0.0, %v1880
      %1882 = vmatmul.bf16.gmra.mxu0 %v935
      %v1883 = vpop.f32.mrf.mxu0
      %v1884 = vadd.f32 0.0, %v1883
      %v1885 = vpop.f32.mrf.mxu0
      %v1886 = vadd.f32 0.0, %v1885
      %1887 = vmatmul.bf16.gmra.mxu0 %v938
      %v1888 = vpop.f32.mrf.mxu0
      %v1889 = vadd.f32 0.0, %v1888
      %v1890 = vpop.f32.mrf.mxu0
      %v1891 = vadd.f32 0.0, %v1890
      %1892 = vmatmul.bf16.gmra.mxu0 %v941
      %v1893 = vpop.f32.mrf.mxu0
      %v1894 = vadd.f32 0.0, %v1893
      %v1895 = vpop.f32.mrf.mxu0
      %v1896 = vadd.f32 0.0, %v1895
      %1897 = vmatmul.bf16.gmra.mxu0 %v944
      %v1898 = vpop.f32.mrf.mxu0
      %v1899 = vadd.f32 0.0, %v1898
      %v1900 = vpop.f32.mrf.mxu0
      %v1901 = vadd.f32 0.0, %v1900
      %1902 = vmatmul.bf16.gmra.mxu0 %v947
      %v1903 = vpop.f32.mrf.mxu0
      %v1904 = vadd.f32 0.0, %v1903
      %v1905 = vpop.f32.mrf.mxu0
      %v1906 = vadd.f32 0.0, %v1905
      %1907 = vmatmul.bf16.gmra.mxu0 %v950
      %v1908 = vpop.f32.mrf.mxu0
      %v1909 = vadd.f32 0.0, %v1908
      %v1910 = vpop.f32.mrf.mxu0
      %v1911 = vadd.f32 0.0, %v1910
      %1912 = vmatmul.bf16.gmra.mxu0 %v953
      %v1913 = vpop.f32.mrf.mxu0
      %v1914 = vadd.f32 0.0, %v1913
      %v1915 = vpop.f32.mrf.mxu0
      %v1916 = vadd.f32 0.0, %v1915
      %1917 = vmatmul.bf16.gmra.mxu0 %v956
      %v1918 = vpop.f32.mrf.mxu0
      %v1919 = vadd.f32 0.0, %v1918
      %v1920 = vpop.f32.mrf.mxu0
      %v1921 = vadd.f32 0.0, %v1920
      %1922 = vmatmul.bf16.gmra.mxu0 %v959
      %v1923 = vpop.f32.mrf.mxu0
      %v1924 = vadd.f32 0.0, %v1923
      %v1925 = vpop.f32.mrf.mxu0
      %v1926 = vadd.f32 0.0, %v1925
      %1927 = vmatmul.bf16.gmra.mxu0 %v1414
      %v1928 = vpop.f32.mrf.mxu0
      %v1929 = vadd.f32 0.0, %v1928
      %v1930 = vpop.f32.mrf.mxu0
      %v1931 = vadd.f32 0.0, %v1930
      %1932 = vmatmul.bf16.gmra.mxu0 %v1844
      %v1933 = vpop.f32.mrf.mxu0
      %v1934 = vadd.f32 0.0, %v1933
      %v1935 = vpop.f32.mrf.mxu0
      %v1936 = vadd.f32 0.0, %v1935
      %1937 = vdwg.mxu0
      %v1938 = vadd.f32 %v1804, %v1859
      %v1939 = vadd.f32 %v1805, %v1861
      %v1940 = vadd.f32 %v1806, %v1864
      %v1941 = vadd.f32 %v1807, %v1866
      %v1942 = vadd.f32 %v1808, %v1869
      %v1943 = vadd.f32 %v1809, %v1871
      %v1944 = vadd.f32 %v1810, %v1874
      %v1945 = vadd.f32 %v1811, %v1876
      %v1946 = vadd.f32 %v1812, %v1879
      %v1947 = vadd.f32 %v1813, %v1881
      %v1948 = vadd.f32 %v1814, %v1884
      %v1949 = vadd.f32 %v1815, %v1886
      %v1950 = vadd.f32 %v1816, %v1889
      %v1951 = vadd.f32 %v1817, %v1891
      %v1952 = vadd.f32 %v1818, %v1894
      %v1953 = vadd.f32 %v1819, %v1896
      %v1954 = vadd.f32 %v1820, %v1899
      %v1955 = vadd.f32 %v1821, %v1901
      %v1956 = vadd.f32 %v1822, %v1904
      %v1957 = vadd.f32 %v1823, %v1906
      %v1958 = vadd.f32 %v1824, %v1909
      %v1959 = vadd.f32 %v1825, %v1911
      %v1960 = vadd.f32 %v1826, %v1914
      %v1961 = vadd.f32 %v1827, %v1916
      %v1962 = vadd.f32 %v1828, %v1919
      %v1963 = vadd.f32 %v1829, %v1921
      %v1964 = vadd.f32 %v1830, %v1924
      %v1965 = vadd.f32 %v1831, %v1926
      %v1966 = vadd.f32 %v1832, %v1929
      %v1967 = vadd.f32 %v1833, %v1931
      %v1968 = vadd.f32 %v1834, %v1934
      %v1969 = vadd.f32 %v1835, %v1936
      %v1971 = vshrl.u32 %v250, 16
      %v1973 = vrot.slane %v1971, 4
      %v1974 = vshll.u32 %v250, 16
      %v1976 = vrot.slane %v1974, 5
      %v1977 = vor.u32 %v1973, %v1976
      %v1978 = vrot.slane %v1977, 4
      %v1980 = vshll.u32 %v251, 16
      %v1982 = vrot.slane %v1980, 5
      %v1983 = vsel %vm256, %v1978, %v1982
      %v1984 = vshrl.u32 %v251, 16
      %v1986 = vrot.slane %v1984, 4
      %v1987 = vor.u32 %v1986, %v1982
      %v1988 = vrot.slane %v1987, 4
      %v1990 = vshll.u32 %v252, 16
      %v1992 = vrot.slane %v1990, 5
      %v1993 = vsel %vm256, %v1988, %v1992
      %s1994 = scalar_lea.vmem %s1, 14
      %v1995 = vld [vmem:[%s1994] sm:$0x3]
      %v1996 = vunpack.c.l.b16 %v1983
      %v1997 = vunpack.c.l.b16 %v1993
      %v1998 = vpack.c.b16 %v1997, %v1996
      %v2000 = vsel %vm691, %v1998, 0
      %v2003 = vsel %vm740, %v1995, 0
      %2005 = vmatpush.bf16.msra.mxu0 0
      %2006 = vmatpush.bf16.msra.mxu0 0
      %2007 = vmatpush.bf16.msra.mxu0 0
      %2008 = vmatpush.bf16.msra.mxu0 0
      %2009 = vmatpush.bf16.msra.mxu0 0
      %2010 = vmatpush.bf16.msra.mxu0 0
      %2011 = vmatpush.bf16.msra.mxu0 0
      %2012 = vmatpush.bf16.msra.mxu0 %v2003
      %2013 = vmatmul.bf16.gmra.mxu0 %v699
      %v2014 = vpop.f32.mrf.mxu0
      %v2015 = vadd.f32 0.0, %v2014
      %v2016 = vpop.f32.mrf.mxu0
      %v2017 = vadd.f32 0.0, %v2016
      %2018 = vmatmul.bf16.gmra.mxu0 %v702
      %v2019 = vpop.f32.mrf.mxu0
      %v2020 = vadd.f32 0.0, %v2019
      %v2021 = vpop.f32.mrf.mxu0
      %v2022 = vadd.f32 0.0, %v2021
      %2023 = vmatmul.bf16.gmra.mxu0 %v705
      %v2024 = vpop.f32.mrf.mxu0
      %v2025 = vadd.f32 0.0, %v2024
      %v2026 = vpop.f32.mrf.mxu0
      %v2027 = vadd.f32 0.0, %v2026
      %2028 = vmatmul.bf16.gmra.mxu0 %v708
      %v2029 = vpop.f32.mrf.mxu0
      %v2030 = vadd.f32 0.0, %v2029
      %v2031 = vpop.f32.mrf.mxu0
      %v2032 = vadd.f32 0.0, %v2031
      %2033 = vmatmul.bf16.gmra.mxu0 %v711
      %v2034 = vpop.f32.mrf.mxu0
      %v2035 = vadd.f32 0.0, %v2034
      %v2036 = vpop.f32.mrf.mxu0
      %v2037 = vadd.f32 0.0, %v2036
      %2038 = vmatmul.bf16.gmra.mxu0 %v714
      %v2039 = vpop.f32.mrf.mxu0
      %v2040 = vadd.f32 0.0, %v2039
      %v2041 = vpop.f32.mrf.mxu0
      %v2042 = vadd.f32 0.0, %v2041
      %2043 = vmatmul.bf16.gmra.mxu0 %v717
      %v2044 = vpop.f32.mrf.mxu0
      %v2045 = vadd.f32 0.0, %v2044
      %v2046 = vpop.f32.mrf.mxu0
      %v2047 = vadd.f32 0.0, %v2046
      %2048 = vmatmul.bf16.gmra.mxu0 %v720
      %v2049 = vpop.f32.mrf.mxu0
      %v2050 = vadd.f32 0.0, %v2049
      %v2051 = vpop.f32.mrf.mxu0
      %v2052 = vadd.f32 0.0, %v2051
      %2053 = vmatmul.bf16.gmra.mxu0 %v723
      %v2054 = vpop.f32.mrf.mxu0
      %v2055 = vadd.f32 0.0, %v2054
      %v2056 = vpop.f32.mrf.mxu0
      %v2057 = vadd.f32 0.0, %v2056
      %2058 = vmatmul.bf16.gmra.mxu0 %v726
      %v2059 = vpop.f32.mrf.mxu0
      %v2060 = vadd.f32 0.0, %v2059
      %v2061 = vpop.f32.mrf.mxu0
      %v2062 = vadd.f32 0.0, %v2061
      %2063 = vmatmul.bf16.gmra.mxu0 %v729
      %v2064 = vpop.f32.mrf.mxu0
      %v2065 = vadd.f32 0.0, %v2064
      %v2066 = vpop.f32.mrf.mxu0
      %v2067 = vadd.f32 0.0, %v2066
      %2068 = vmatmul.bf16.gmra.mxu0 %v732
      %v2069 = vpop.f32.mrf.mxu0
      %v2070 = vadd.f32 0.0, %v2069
      %v2071 = vpop.f32.mrf.mxu0
      %v2072 = vadd.f32 0.0, %v2071
      %2073 = vmatmul.bf16.gmra.mxu0 %v735
      %v2074 = vpop.f32.mrf.mxu0
      %v2075 = vadd.f32 0.0, %v2074
      %v2076 = vpop.f32.mrf.mxu0
      %v2077 = vadd.f32 0.0, %v2076
      %2078 = vmatmul.bf16.gmra.mxu0 %v738
      %v2079 = vpop.f32.mrf.mxu0
      %v2080 = vadd.f32 0.0, %v2079
      %v2081 = vpop.f32.mrf.mxu0
      %v2082 = vadd.f32 0.0, %v2081
      %2083 = vmatmul.bf16.gmra.mxu0 %v1570
      %v2084 = vpop.f32.mrf.mxu0
      %v2085 = vadd.f32 0.0, %v2084
      %v2086 = vpop.f32.mrf.mxu0
      %v2087 = vadd.f32 0.0, %v2086
      %2088 = vmatmul.bf16.gmra.mxu0 %v2000
      %v2089 = vpop.f32.mrf.mxu0
      %v2090 = vadd.f32 0.0, %v2089
      %v2091 = vpop.f32.mrf.mxu0
      %v2092 = vadd.f32 0.0, %v2091
      %2093 = vdwg.mxu0
      %v2094 = vadd.f32 %v1938, %v2015
      %v2095 = vadd.f32 %v1939, %v2017
      %v2096 = vadd.f32 %v1940, %v2020
      %v2097 = vadd.f32 %v1941, %v2022
      %v2098 = vadd.f32 %v1942, %v2025
      %v2099 = vadd.f32 %v1943, %v2027
      %v2100 = vadd.f32 %v1944, %v2030
      %v2101 = vadd.f32 %v1945, %v2032
      %v2102 = vadd.f32 %v1946, %v2035
      %v2103 = vadd.f32 %v1947, %v2037
      %v2104 = vadd.f32 %v1948, %v2040
      %v2105 = vadd.f32 %v1949, %v2042
      %v2106 = vadd.f32 %v1950, %v2045
      %v2107 = vadd.f32 %v1951, %v2047
      %v2108 = vadd.f32 %v1952, %v2050
      %v2109 = vadd.f32 %v1953, %v2052
      %v2110 = vadd.f32 %v1954, %v2055
      %v2111 = vadd.f32 %v1955, %v2057
      %v2112 = vadd.f32 %v1956, %v2060
      %v2113 = vadd.f32 %v1957, %v2062
      %v2114 = vadd.f32 %v1958, %v2065
      %v2115 = vadd.f32 %v1959, %v2067
      %v2116 = vadd.f32 %v1960, %v2070
      %v2117 = vadd.f32 %v1961, %v2072
      %v2118 = vadd.f32 %v1962, %v2075
      %v2119 = vadd.f32 %v1963, %v2077
      %v2120 = vadd.f32 %v1964, %v2080
      %v2121 = vadd.f32 %v1965, %v2082
      %v2122 = vadd.f32 %v1966, %v2085
      %v2123 = vadd.f32 %v1967, %v2087
      %v2124 = vadd.f32 %v1968, %v2090
      %v2125 = vadd.f32 %v1969, %v2092
      %v2127 = vrot.slane %v250, 5
      %v2128 = vrot.slane %v2127, 4
      %v2129 = vrot.slane %v251, 5
      %v2130 = vsel %vm1071, %v2128, %v2129
      %v2131 = vrot.slane %v2129, 4
      %v2132 = vrot.slane %v252, 5
      %v2133 = vsel %vm1071, %v2131, %v2132
      %s2134 = scalar_lea.vmem %s1, 16
      %v2135 = vld [vmem:[%s2134] sm:$0x3]
      %v2136 = vunpack.c.l.b16 %v2130
      %v2137 = vunpack.c.l.b16 %v2133
      %v2138 = vpack.c.b16 %v2137, %v2136
      %v2140 = vsel %vm691, %v2138, 0
      %v2143 = vsel %vm740, %v2135, 0
      %2145 = vmatpush.bf16.msra.mxu0 0
      %2146 = vmatpush.bf16.msra.mxu0 0
      %2147 = vmatpush.bf16.msra.mxu0 0
      %2148 = vmatpush.bf16.msra.mxu0 0
      %2149 = vmatpush.bf16.msra.mxu0 0
      %2150 = vmatpush.bf16.msra.mxu0 0
      %2151 = vmatpush.bf16.msra.mxu0 0
      %2152 = vmatpush.bf16.msra.mxu0 %v2143
      %2153 = vmatmul.bf16.gmra.mxu0 %v1241
      %v2154 = vpop.f32.mrf.mxu0
      %v2155 = vadd.f32 0.0, %v2154
      %v2156 = vpop.f32.mrf.mxu0
      %v2157 = vadd.f32 0.0, %v2156
      %2158 = vmatmul.bf16.gmra.mxu0 %v1244
      %v2159 = vpop.f32.mrf.mxu0
      %v2160 = vadd.f32 0.0, %v2159
      %v2161 = vpop.f32.mrf.mxu0
      %v2162 = vadd.f32 0.0, %v2161
      %2163 = vmatmul.bf16.gmra.mxu0 %v1247
      %v2164 = vpop.f32.mrf.mxu0
      %v2165 = vadd.f32 0.0, %v2164
      %v2166 = vpop.f32.mrf.mxu0
      %v2167 = vadd.f32 0.0, %v2166
      %2168 = vmatmul.bf16.gmra.mxu0 %v1250
      %v2169 = vpop.f32.mrf.mxu0
      %v2170 = vadd.f32 0.0, %v2169
      %v2171 = vpop.f32.mrf.mxu0
      %v2172 = vadd.f32 0.0, %v2171
      %2173 = vmatmul.bf16.gmra.mxu0 %v1253
      %v2174 = vpop.f32.mrf.mxu0
      %v2175 = vadd.f32 0.0, %v2174
      %v2176 = vpop.f32.mrf.mxu0
      %v2177 = vadd.f32 0.0, %v2176
      %2178 = vmatmul.bf16.gmra.mxu0 %v1256
      %v2179 = vpop.f32.mrf.mxu0
      %v2180 = vadd.f32 0.0, %v2179
      %v2181 = vpop.f32.mrf.mxu0
      %v2182 = vadd.f32 0.0, %v2181
      %2183 = vmatmul.bf16.gmra.mxu0 %v1259
      %v2184 = vpop.f32.mrf.mxu0
      %v2185 = vadd.f32 0.0, %v2184
      %v2186 = vpop.f32.mrf.mxu0
      %v2187 = vadd.f32 0.0, %v2186
      %2188 = vmatmul.bf16.gmra.mxu0 %v1262
      %v2189 = vpop.f32.mrf.mxu0
      %v2190 = vadd.f32 0.0, %v2189
      %v2191 = vpop.f32.mrf.mxu0
      %v2192 = vadd.f32 0.0, %v2191
      %2193 = vmatmul.bf16.gmra.mxu0 %v1265
      %v2194 = vpop.f32.mrf.mxu0
      %v2195 = vadd.f32 0.0, %v2194
      %v2196 = vpop.f32.mrf.mxu0
      %v2197 = vadd.f32 0.0, %v2196
      %2198 = vmatmul.bf16.gmra.mxu0 %v1268
      %v2199 = vpop.f32.mrf.mxu0
      %v2200 = vadd.f32 0.0, %v2199
      %v2201 = vpop.f32.mrf.mxu0
      %v2202 = vadd.f32 0.0, %v2201
      %2203 = vmatmul.bf16.gmra.mxu0 %v1271
      %v2204 = vpop.f32.mrf.mxu0
      %v2205 = vadd.f32 0.0, %v2204
      %v2206 = vpop.f32.mrf.mxu0
      %v2207 = vadd.f32 0.0, %v2206
      %2208 = vmatmul.bf16.gmra.mxu0 %v1274
      %v2209 = vpop.f32.mrf.mxu0
      %v2210 = vadd.f32 0.0, %v2209
      %v2211 = vpop.f32.mrf.mxu0
      %v2212 = vadd.f32 0.0, %v2211
      %2213 = vmatmul.bf16.gmra.mxu0 %v1277
      %v2214 = vpop.f32.mrf.mxu0
      %v2215 = vadd.f32 0.0, %v2214
      %v2216 = vpop.f32.mrf.mxu0
      %v2217 = vadd.f32 0.0, %v2216
      %2218 = vmatmul.bf16.gmra.mxu0 %v1280
      %v2219 = vpop.f32.mrf.mxu0
      %v2220 = vadd.f32 0.0, %v2219
      %v2221 = vpop.f32.mrf.mxu0
      %v2222 = vadd.f32 0.0, %v2221
      %2223 = vmatmul.bf16.gmra.mxu0 %v1710
      %v2224 = vpop.f32.mrf.mxu0
      %v2225 = vadd.f32 0.0, %v2224
      %v2226 = vpop.f32.mrf.mxu0
      %v2227 = vadd.f32 0.0, %v2226
      %2228 = vmatmul.bf16.gmra.mxu0 %v2140
      %v2229 = vpop.f32.mrf.mxu0
      %v2230 = vadd.f32 0.0, %v2229
      %v2231 = vpop.f32.mrf.mxu0
      %v2232 = vadd.f32 0.0, %v2231
      %2233 = vdwg.mxu0
      %v2234 = vadd.f32 %v2094, %v2155
      %v2235 = vadd.f32 %v2095, %v2157
      %v2236 = vadd.f32 %v2096, %v2160
      %v2237 = vadd.f32 %v2097, %v2162
      %v2238 = vadd.f32 %v2098, %v2165
      %v2239 = vadd.f32 %v2099, %v2167
      %v2240 = vadd.f32 %v2100, %v2170
      %v2241 = vadd.f32 %v2101, %v2172
      %v2242 = vadd.f32 %v2102, %v2175
      %v2243 = vadd.f32 %v2103, %v2177
      %v2244 = vadd.f32 %v2104, %v2180
      %v2245 = vadd.f32 %v2105, %v2182
      %v2246 = vadd.f32 %v2106, %v2185
      %v2247 = vadd.f32 %v2107, %v2187
      %v2248 = vadd.f32 %v2108, %v2190
      %v2249 = vadd.f32 %v2109, %v2192
      %v2250 = vadd.f32 %v2110, %v2195
      %v2251 = vadd.f32 %v2111, %v2197
      %v2252 = vadd.f32 %v2112, %v2200
      %v2253 = vadd.f32 %v2113, %v2202
      %v2254 = vadd.f32 %v2114, %v2205
      %v2255 = vadd.f32 %v2115, %v2207
      %v2256 = vadd.f32 %v2116, %v2210
      %v2257 = vadd.f32 %v2117, %v2212
      %v2258 = vadd.f32 %v2118, %v2215
      %v2259 = vadd.f32 %v2119, %v2217
      %v2260 = vadd.f32 %v2120, %v2220
      %v2261 = vadd.f32 %v2121, %v2222
      %v2262 = vadd.f32 %v2122, %v2225
      %v2263 = vadd.f32 %v2123, %v2227
      %v2264 = vadd.f32 %v2124, %v2230
      %v2265 = vadd.f32 %v2125, %v2232
      %v2266 = vld [vmem:[%s2] sm:$0x1]
      %v2268 = vperm.slane %v2266, 0
      %v2270 = vadd.f32 %v2234, %v2268
      %v2271 = vadd.f32 %v2235, %v2268
      %v2272 = vadd.f32 %v2236, %v2268
      %v2273 = vadd.f32 %v2237, %v2268
      %v2274 = vadd.f32 %v2238, %v2268
      %v2275 = vadd.f32 %v2239, %v2268
      %v2276 = vadd.f32 %v2240, %v2268
      %v2277 = vadd.f32 %v2241, %v2268
      %v2278 = vadd.f32 %v2242, %v2268
      %v2279 = vadd.f32 %v2243, %v2268
      %v2280 = vadd.f32 %v2244, %v2268
      %v2281 = vadd.f32 %v2245, %v2268
      %v2282 = vadd.f32 %v2246, %v2268
      %v2283 = vadd.f32 %v2247, %v2268
      %v2284 = vadd.f32 %v2248, %v2268
      %v2285 = vadd.f32 %v2249, %v2268
      %v2286 = vadd.f32 %v2250, %v2268
      %v2287 = vadd.f32 %v2251, %v2268
      %v2288 = vadd.f32 %v2252, %v2268
      %v2289 = vadd.f32 %v2253, %v2268
      %v2290 = vadd.f32 %v2254, %v2268
      %v2291 = vadd.f32 %v2255, %v2268
      %v2292 = vadd.f32 %v2256, %v2268
      %v2293 = vadd.f32 %v2257, %v2268
      %v2294 = vadd.f32 %v2258, %v2268
      %v2295 = vadd.f32 %v2259, %v2268
      %v2296 = vadd.f32 %v2260, %v2268
      %v2297 = vadd.f32 %v2261, %v2268
      %v2298 = vadd.f32 %v2262, %v2268
      %v2299 = vadd.f32 %v2263, %v2268
      %v2300 = vadd.f32 %v2264, %v2268
      %v2301 = vadd.f32 %v2265, %v2268
      %v2302 = vmax.f32 %v2270, 0.0
      %v2303 = vmax.f32 %v2271, 0.0
      %v2304 = vmax.f32 %v2272, 0.0
      %v2305 = vmax.f32 %v2273, 0.0
      %v2306 = vmax.f32 %v2274, 0.0
      %v2307 = vmax.f32 %v2275, 0.0
      %v2308 = vmax.f32 %v2276, 0.0
      %v2309 = vmax.f32 %v2277, 0.0
      %v2310 = vmax.f32 %v2278, 0.0
      %v2311 = vmax.f32 %v2279, 0.0
      %v2312 = vmax.f32 %v2280, 0.0
      %v2313 = vmax.f32 %v2281, 0.0
      %v2314 = vmax.f32 %v2282, 0.0
      %v2315 = vmax.f32 %v2283, 0.0
      %v2316 = vmax.f32 %v2284, 0.0
      %v2317 = vmax.f32 %v2285, 0.0
      %v2318 = vmax.f32 %v2286, 0.0
      %v2319 = vmax.f32 %v2287, 0.0
      %v2320 = vmax.f32 %v2288, 0.0
      %v2321 = vmax.f32 %v2289, 0.0
      %v2322 = vmax.f32 %v2290, 0.0
      %v2323 = vmax.f32 %v2291, 0.0
      %v2324 = vmax.f32 %v2292, 0.0
      %v2325 = vmax.f32 %v2293, 0.0
      %v2326 = vmax.f32 %v2294, 0.0
      %v2327 = vmax.f32 %v2295, 0.0
      %v2328 = vmax.f32 %v2296, 0.0
      %v2329 = vmax.f32 %v2297, 0.0
      %v2330 = vmax.f32 %v2298, 0.0
      %v2331 = vmax.f32 %v2299, 0.0
      %v2332 = vmax.f32 %v2300, 0.0
      %v2333 = vmax.f32 %v2301, 0.0
      %vm2334 = vcmask 261120
      %2335 = vst.msk [vmem:[%s192] sm:$0xff] %vm2334, %v2302
      %2336 = vst.msk [vmem:[%s192 + $0x8] sm:$0xff] %vm2334, %v2303
      %2337 = vst.msk [vmem:[%s192 + $0x10] sm:$0xff] %vm2334, %v2304
      %2338 = vst.msk [vmem:[%s192 + $0x18] sm:$0xff] %vm2334, %v2305
      %2339 = vst.msk [vmem:[%s192 + $0x20] sm:$0xff] %vm2334, %v2306
      %2340 = vst.msk [vmem:[%s192 + $0x28] sm:$0xff] %vm2334, %v2307
      %2341 = vst.msk [vmem:[%s192 + $0x30] sm:$0xff] %vm2334, %v2308
      %2342 = vst.msk [vmem:[%s192 + $0x38] sm:$0xff] %vm2334, %v2309
      %2343 = vst.msk [vmem:[%s192 + $0x40] sm:$0xff] %vm2334, %v2310
      %2344 = vst.msk [vmem:[%s192 + $0x48] sm:$0xff] %vm2334, %v2311
      %2345 = vst.msk [vmem:[%s192 + $0x50] sm:$0xff] %vm2334, %v2312
      %2346 = vst.msk [vmem:[%s192 + $0x58] sm:$0xff] %vm2334, %v2313
      %2347 = vst.msk [vmem:[%s192 + $0x60] sm:$0xff] %vm2334, %v2314
      %2348 = vst.msk [vmem:[%s192 + $0x68] sm:$0xff] %vm2334, %v2315
      %2349 = vst.msk [vmem:[%s192 + $0x70] sm:$0xff] %vm2334, %v2316
      %2350 = vst.msk [vmem:[%s192 + $0x78] sm:$0xff] %vm2334, %v2317
      %2351 = vst.msk [vmem:[%s192 + $0x80] sm:$0xff] %vm2334, %v2318
      %2352 = vst.msk [vmem:[%s192 + $0x88] sm:$0xff] %vm2334, %v2319
      %2353 = vst.msk [vmem:[%s192 + $0x90] sm:$0xff] %vm2334, %v2320
      %2354 = vst.msk [vmem:[%s192 + $0x98] sm:$0xff] %vm2334, %v2321
      %2355 = vst.msk [vmem:[%s192 + $0xa0] sm:$0xff] %vm2334, %v2322
      %2356 = vst.msk [vmem:[%s192 + $0xa8] sm:$0xff] %vm2334, %v2323
      %2357 = vst.msk [vmem:[%s192 + $0xb0] sm:$0xff] %vm2334, %v2324
      %2358 = vst.msk [vmem:[%s192 + $0xb8] sm:$0xff] %vm2334, %v2325
      %2359 = vst.msk [vmem:[%s192 + $0xc0] sm:$0xff] %vm2334, %v2326
      %2360 = vst.msk [vmem:[%s192 + $0xc8] sm:$0xff] %vm2334, %v2327
      %2361 = vst.msk [vmem:[%s192 + $0xd0] sm:$0xff] %vm2334, %v2328
      %2362 = vst.msk [vmem:[%s192 + $0xd8] sm:$0xff] %vm2334, %v2329
      %2363 = vst.msk [vmem:[%s192 + $0xe0] sm:$0xff] %vm2334, %v2330
      %2364 = vst.msk [vmem:[%s192 + $0xe8] sm:$0xff] %vm2334, %v2331
      %2365 = vst.msk [vmem:[%s192 + $0xf0] sm:$0xff] %vm2334, %v2332
      %2366 = vst.msk [vmem:[%s192 + $0xf8] sm:$0xff] %vm2334, %v2333
      %s2367 = smul.u32 32, %s19
      %p2368 = scmp.lt.s32.totalorder %s18, 1
      %s2369 = scalar_select %p2368, %s18, 1
      %p2370 = scmp.lt.s32.totalorder %s2367, 31
      %s2371 = scalar_select %p2370, %s2367, 31
      %s2372 = smul.addr %s2369, 32
      %s2373 = sadd.s32 %s2371, %s2372
      %s2374 = smul.addr %s2373, 8
      %s2375 = scalar_lea.vmem %s3, %s2374
      // Predicated region
      $region33: #{decoder_block_forward.1} parent=31 // pred_check
        %p2376 = pneg %p114
      $region34: #{decoder_block_forward.1} parent=31 // pred_check_branch
        %2378 = sbr.rel (%p2376) target = $region36
      $region35: #{decoder_block_forward.1} parent=31 // pred_region
        %s2379 = smul.u32 32, %s19
      $region36: #{decoder_block_forward.1} parent=31 // pred_fallthru
        _
    $region32: #{decoder_block_forward.1} parent=5 // pred_fallthru
      _
    %p2380 = scmp.le.s32.totalorder 2, %s9
    // Predicated region
    $region37: #{decoder_block_forward.1} parent=5 // pred_check
      %p2381 = pneg %p2380
    $region38: #{decoder_block_forward.1} parent=5 // pred_check_branch
      %2383 = sbr.rel (%p2381) target = $region40
    $region39: #{decoder_block_forward.1} parent=5 // pred_region
      %s2384 = ssub.s32 %s9, 2
      // Predicated region
      $region41: #{decoder_block_forward.1} parent=39 // pred_check
        %p2385 = pneg %p120
      $region42: #{decoder_block_forward.1} parent=39 // pred_check_branch
        %2387 = sbr.rel (%p2385) target = $region44
      $region43: #{decoder_block_forward.1} parent=39 // pred_region
        %s2388 = smul.u32 32, %s21
        %p2389 = scmp.lt.s32.totalorder %s20, 1
        %s2390 = scalar_select %p2389, %s20, 1
        %p2391 = scmp.lt.s32.totalorder %s2388, 31
        %s2392 = scalar_select %p2391, %s2388, 31
        %s2393 = smul.addr %s2390, 32
        %s2394 = sadd.s32 %s2392, %s2393
        %s2395 = smul.addr %s2394, 8
        %s2396 = scalar_lea.vmem %s3, %s2395
      $region44: #{decoder_block_forward.1} parent=39 // pred_fallthru
        _
    $region40: #{decoder_block_forward.1} parent=5 // pred_fallthru
      _
  $region6: #{decoder_block_forward.1} parent=0 // loop_footer
    %s13 = sadd.s32 1, %s9
  $region7: #{decoder_block_forward.1} parent=0 // loop_footer_branch
    %8 = sbr.rel target = $region3
  $region8: #{decoder_block_forward.1} parent=0 // loop_exit
    _

</llo_original>
